<compile_context>
chip_gen: v7x
topology: tpu7x:2x2x1
jax: 0.10.0
libtpu: 0.0.40
codegen_flags: <defaults>
</compile_context>

<pallas_src>
import functools

import jax
import jax.numpy as jnp
from jax.experimental import pallas as pl
from jax.experimental.pallas import tpu as pltpu

LANES = 128
SUBLANES = 8


def actor_kernel(s_ref, w1_ref, b1_ref, w2_ref, b2_ref, w3_ref, b3_ref, out_ref):
    # layer 1: Linear(state_dim, 800) + ReLU   (bf16 MXU inputs, f32 accumulation)
    x = s_ref[...].astype(jnp.bfloat16)
    h1 = jnp.dot(x, w1_ref[...], preferred_element_type=jnp.float32)
    h1 = jnp.maximum(h1 + b1_ref[...], 0.0).astype(jnp.bfloat16)
    # layer 2: Linear(800, 600) + ReLU
    h2 = jnp.dot(h1, w2_ref[...], preferred_element_type=jnp.float32)
    h2 = jnp.maximum(h2 + b2_ref[...], 0.0).astype(jnp.bfloat16)
    # layer 3: Linear(600, action_dim padded to 128) + Tanh (lane-dense store)
    h3 = jnp.dot(h2, w3_ref[...], preferred_element_type=jnp.float32)
    out_ref[...] = jnp.tanh(h3 + b3_ref[...]).astype(out_ref.dtype)


def _round_up(x, m):
    return ((x + m - 1) // m) * m


@functools.partial(jax.jit, static_argnames=("tm_max",))
def actor_forward(s, w1, b1, w2, b2, w3, b3, *, tm_max=256):
    batch, state_dim = s.shape
    action_dim = w3.shape[1]

    # --- weight bytes: bf16 streaming (memory-bound kernel) ------------------
    w1b = w1.astype(jnp.bfloat16)
    w2b = w2.astype(jnp.bfloat16)

    # --- lane-dense final layer: pad action_dim up to a multiple of 128 ------
    out_pad = _round_up(action_dim, LANES)
    w3p = jnp.zeros((w3.shape[0], out_pad), jnp.bfloat16)
    w3p = w3p.at[:, :action_dim].set(w3.astype(jnp.bfloat16))
    b3p = jnp.zeros((1, out_pad), jnp.float32).at[:, :action_dim].set(b3)

    # --- batch tiling: grid over batch; weights VMEM-resident across steps ---
    tm = min(tm_max, max(SUBLANES, _round_up(batch, SUBLANES)))
    batch_p = _round_up(batch, tm)
    if batch_p != batch:
        s = jnp.pad(s, ((0, batch_p - batch), (0, 0)))
    grid = (batch_p // tm,)

    const = lambda shape: pl.BlockSpec(shape, lambda i: (0, 0))

    out = pl.pallas_call(
        actor_kernel,
        out_shape=jax.ShapeDtypeStruct((batch_p, out_pad), jnp.float32),
        grid=grid,
        in_specs=[
            pl.BlockSpec((tm, state_dim), lambda i: (i, 0)),
            const(w1b.shape), const(b1.shape),
            const(w2b.shape), const(b2.shape),
            const(w3p.shape), const(b3p.shape),
        ],
        out_specs=pl.BlockSpec((tm, out_pad), lambda i: (i, 0)),
        compiler_params=pltpu.CompilerParams(
            dimension_semantics=("parallel",),
            vmem_limit_bytes=16 << 20,
        ),
    )(s, w1b, b1, w2b, b2, w3p, b3p)

    return out[:batch, :action_dim]


def init_params(key, state_dim, action_dim):
    """Deterministic synthetic init (PyTorch-Linear-style uniform ranges)."""
    dims = [(state_dim, 800), (800, 600), (600, action_dim)]
    params = []
    for i, (fan_in, fan_out) in enumerate(dims):
        kw, kb = jax.random.split(jax.random.fold_in(key, i))
        bound = 1.0 / jnp.sqrt(float(fan_in))
        w = jax.random.uniform(kw, (fan_in, fan_out), jnp.float32, -bound, bound)
        b = jax.random.uniform(kb, (1, fan_out), jnp.float32, -bound, bound)
        params += [w, b]
    return params


def reference_forward(s, w1, b1, w2, b2, w3, b3):
    h1 = jnp.maximum(s @ w1 + b1, 0.0)
    h2 = jnp.maximum(h1 @ w2 + b2, 0.0)
    return jnp.tanh(h2 @ w3 + b3)


if __name__ == "__main__":
    key = jax.random.PRNGKey(0)
    batch, state_dim, action_dim = 8, 24, 2

    k_s, k_p = jax.random.split(key)
    s = jax.random.normal(k_s, (batch, state_dim), jnp.float32)
    params = init_params(k_p, state_dim, action_dim)

    out = actor_forward(s, *params)
    out = jax.block_until_ready(out)

    ref = reference_forward(s, *params)  # full-f32 reference
    assert out.shape == (batch, action_dim)
    # bf16 weights/activations with f32 accumulation: validate at ~1e-2 level.
    assert jnp.allclose(out, ref, atol=3e-2, rtol=3e-2), float(jnp.max(jnp.abs(out - ref)))

    print("KERNEL_OK")
</pallas_src>

<mosaic_0001>
module attributes {stable_mosaic.version = 11 : i64} {
  func.func @actor_kernel(%arg0: i32, %arg1: memref<8x24xf32, #tpu.memory_space<vmem>>, %arg2: memref<24x800xbf16, #tpu.memory_space<vmem>>, %arg3: memref<1x800xf32, #tpu.memory_space<vmem>>, %arg4: memref<800x600xbf16, #tpu.memory_space<vmem>>, %arg5: memref<1x600xf32, #tpu.memory_space<vmem>>, %arg6: memref<600x128xbf16, #tpu.memory_space<vmem>>, %arg7: memref<1x128xf32, #tpu.memory_space<vmem>>, %arg8: memref<8x128xf32, #tpu.memory_space<vmem>>) attributes {dimension_semantics = [#tpu.dimension_semantics<parallel>], iteration_bounds = array<i64: 1>, scalar_prefetch = 0 : i64, scratch_operands = 0 : i64, tpu.core_type = #tpu.core_type<tc>, window_params = [{transform_indices = @transform_0, window_bounds = array<i64: 8, 24>}, {pipeline_mode = #tpu.pipeline_mode<synchronous>, transform_indices = @transform_1, window_bounds = array<i64: 24, 800>}, {pipeline_mode = #tpu.pipeline_mode<synchronous>, transform_indices = @transform_2, window_bounds = array<i64: 1, 800>}, {pipeline_mode = #tpu.pipeline_mode<synchronous>, transform_indices = @transform_3, window_bounds = array<i64: 800, 600>}, {pipeline_mode = #tpu.pipeline_mode<synchronous>, transform_indices = @transform_4, window_bounds = array<i64: 1, 600>}, {pipeline_mode = #tpu.pipeline_mode<synchronous>, transform_indices = @transform_5, window_bounds = array<i64: 600, 128>}, {pipeline_mode = #tpu.pipeline_mode<synchronous>, transform_indices = @transform_6, window_bounds = array<i64: 1, 128>}, {transform_indices = @transform_7, window_bounds = array<i64: 8, 128>}]} {
    %c0 = arith.constant 0 : index
    %c0_0 = arith.constant 0 : index
    %0 = vector.load %arg1[%c0, %c0_0] : memref<8x24xf32, #tpu.memory_space<vmem>>, vector<8x24xf32>
    %1 = arith.truncf %0 : vector<8x24xf32> to vector<8x24xbf16>
    %c0_1 = arith.constant 0 : index
    %c0_2 = arith.constant 0 : index
    %2 = vector.load %arg2[%c0_1, %c0_2] : memref<24x800xbf16, #tpu.memory_space<vmem>>, vector<24x800xbf16>
    %cst = arith.constant dense<0.000000e+00> : vector<8x800xf32>
    %3 = tpu.matmul %1, %2, %cst {dimension_numbers = #tpu.dot_dimension_numbers<[1], [0], [0], [1], [0, 0, 1, 1], [], []>} : vector<8x24xbf16>, vector<24x800xbf16>, vector<8x800xf32> -> vector<8x800xf32>
    %c0_3 = arith.constant 0 : index
    %c0_4 = arith.constant 0 : index
    %4 = vector.load %arg3[%c0_3, %c0_4] : memref<1x800xf32, #tpu.memory_space<vmem>>, vector<1x800xf32>
    %5 = vector.broadcast %4 : vector<1x800xf32> to vector<8x800xf32>
    %6 = arith.addf %3, %5 : vector<8x800xf32>
    %cst_5 = arith.constant 0.000000e+00 : f32
    %7 = vector.broadcast %cst_5 : f32 to vector<8x800xf32>
    %8 = arith.maximumf %6, %7 : vector<8x800xf32>
    %9 = arith.truncf %8 : vector<8x800xf32> to vector<8x800xbf16>
    %c0_6 = arith.constant 0 : index
    %c0_7 = arith.constant 0 : index
    %10 = vector.load %arg4[%c0_6, %c0_7] : memref<800x600xbf16, #tpu.memory_space<vmem>>, vector<800x600xbf16>
    %cst_8 = arith.constant dense<0.000000e+00> : vector<8x600xf32>
    %11 = tpu.matmul %9, %10, %cst_8 {dimension_numbers = #tpu.dot_dimension_numbers<[1], [0], [0], [1], [0, 0, 1, 1], [], []>} : vector<8x800xbf16>, vector<800x600xbf16>, vector<8x600xf32> -> vector<8x600xf32>
    %c0_9 = arith.constant 0 : index
    %c0_10 = arith.constant 0 : index
    %12 = vector.load %arg5[%c0_9, %c0_10] : memref<1x600xf32, #tpu.memory_space<vmem>>, vector<1x600xf32>
    %13 = vector.broadcast %12 : vector<1x600xf32> to vector<8x600xf32>
    %14 = arith.addf %11, %13 : vector<8x600xf32>
    %cst_11 = arith.constant 0.000000e+00 : f32
    %15 = vector.broadcast %cst_11 : f32 to vector<8x600xf32>
    %16 = arith.maximumf %14, %15 : vector<8x600xf32>
    %17 = arith.truncf %16 : vector<8x600xf32> to vector<8x600xbf16>
    %c0_12 = arith.constant 0 : index
    %c0_13 = arith.constant 0 : index
    %18 = vector.load %arg6[%c0_12, %c0_13] : memref<600x128xbf16, #tpu.memory_space<vmem>>, vector<600x128xbf16>
    %cst_14 = arith.constant dense<0.000000e+00> : vector<8x128xf32>
    %19 = tpu.matmul %17, %18, %cst_14 {dimension_numbers = #tpu.dot_dimension_numbers<[1], [0], [0], [1], [0, 0, 1, 1], [], []>} : vector<8x600xbf16>, vector<600x128xbf16>, vector<8x128xf32> -> vector<8x128xf32>
    %c0_15 = arith.constant 0 : index
    %c0_16 = arith.constant 0 : index
    %20 = vector.load %arg7[%c0_15, %c0_16] : memref<1x128xf32, #tpu.memory_space<vmem>>, vector<1x128xf32>
    %21 = vector.broadcast %20 : vector<1x128xf32> to vector<8x128xf32>
    %22 = arith.addf %19, %21 : vector<8x128xf32>
    %23 = math.tanh %22 : vector<8x128xf32>
    %c0_17 = arith.constant 0 : index
    %c0_18 = arith.constant 0 : index
    %24 = vector.load %arg8[%c0_17, %c0_18] : memref<8x128xf32, #tpu.memory_space<vmem>>, vector<8x128xf32>
    tpu.vector_store %arg8[%c0_17, %c0_18], %23 {strides = array<i32>} : memref<8x128xf32, #tpu.memory_space<vmem>>, vector<8x128xf32>,
    return
  }
  func.func @transform_0(%arg0: i32) -> (i32, i32) {
    %c0_i32 = arith.constant 0 : i32
    %c0_i32_0 = arith.constant 0 : i32
    return %arg0, %c0_i32 : i32, i32
  }
  func.func @transform_1(%arg0: i32) -> (i32, i32) {
    %c0_i32 = arith.constant 0 : i32
    %c0_i32_0 = arith.constant 0 : i32
    %c0_i32_1 = arith.constant 0 : i32
    return %c0_i32, %c0_i32_0 : i32, i32
  }
  func.func @transform_2(%arg0: i32) -> (i32, i32) {
    %c0_i32 = arith.constant 0 : i32
    %c0_i32_0 = arith.constant 0 : i32
    %c0_i32_1 = arith.constant 0 : i32
    return %c0_i32, %c0_i32_0 : i32, i32
  }
  func.func @transform_3(%arg0: i32) -> (i32, i32) {
    %c0_i32 = arith.constant 0 : i32
    %c0_i32_0 = arith.constant 0 : i32
    %c0_i32_1 = arith.constant 0 : i32
    return %c0_i32, %c0_i32_0 : i32, i32
  }
  func.func @transform_4(%arg0: i32) -> (i32, i32) {
    %c0_i32 = arith.constant 0 : i32
    %c0_i32_0 = arith.constant 0 : i32
    %c0_i32_1 = arith.constant 0 : i32
    return %c0_i32, %c0_i32_0 : i32, i32
  }
  func.func @transform_5(%arg0: i32) -> (i32, i32) {
    %c0_i32 = arith.constant 0 : i32
    %c0_i32_0 = arith.constant 0 : i32
    %c0_i32_1 = arith.constant 0 : i32
    return %c0_i32, %c0_i32_0 : i32, i32
  }
  func.func @transform_6(%arg0: i32) -> (i32, i32) {
    %c0_i32 = arith.constant 0 : i32
    %c0_i32_0 = arith.constant 0 : i32
    %c0_i32_1 = arith.constant 0 : i32
    return %c0_i32, %c0_i32_0 : i32, i32
  }
  func.func @transform_7(%arg0: i32) -> (i32, i32) {
    %c0_i32 = arith.constant 0 : i32
    %c0_i32_0 = arith.constant 0 : i32
    return %arg0, %c0_i32 : i32, i32
  }
}

</mosaic_0001>

<llo_original>
// kernel: actor_forward.1
$region0: #{actor_forward.1}
  #allocation0 [shape = 'u32[]', space=smem, size = 0x4, offset = 0x4, fixed_abs, tag = 'smem constant byte address 0x4 - core index']
  #allocation1 [shape = 'u32[144,128]{1,0:T(1,128)}', space=vmem, size = 0x12000, scoped, tag = 'internal scratch']
  %s0 = inlined_call_operand.vmem [shape: f32[8,24], index: 0, kind: input, shape index: {}]
  %s1 = inlined_call_operand.vmem [shape: bf16[24,800], index: 1, kind: input, shape index: {}]
  %s2 = inlined_call_operand.vmem [shape: f32[1,800], index: 2, kind: input, shape index: {}]
  %s3 = inlined_call_operand.vmem [shape: bf16[800,600], index: 3, kind: input, shape index: {}]
  %s4 = inlined_call_operand.vmem [shape: f32[1,600], index: 4, kind: input, shape index: {}]
  %s5 = inlined_call_operand.vmem [shape: bf16[600,128], index: 5, kind: input, shape index: {}]
  %s6 = inlined_call_operand.vmem [shape: f32[1,128], index: 6, kind: input, shape index: {}]
  %s7 = inlined_call_operand.vmem [shape: f32[8,128], index: 7, kind: output, shape index: {}]
  %s8 = sld [smem:[#allocation0]]
  $region38: #{actor_forward.1} parent=0
    _
  %s10 = ssub.s32 1, %s8
  %s11 = scalar_select 0, %s10, %s8
  // Predicated region
  $region2: #{actor_forward.1} parent=0 // pred_check
    _
  $region3: #{actor_forward.1} parent=0 // pred_check_branch
    %13 = sbr.rel (0) target = $region5
  $region4: #{actor_forward.1} parent=0 // pred_region
    _
  $region5: #{actor_forward.1} parent=0 // pred_fallthru
    _
  // Predicated region
  $region6: #{actor_forward.1} parent=0 // pred_check
    _
  $region7: #{actor_forward.1} parent=0 // pred_check_branch
    %15 = sbr.rel (0) target = $region9
  $region8: #{actor_forward.1} parent=0 // pred_region
    _
  $region9: #{actor_forward.1} parent=0 // pred_fallthru
    _
  // Predicated region
  $region10: #{actor_forward.1} parent=0 // pred_check
    _
  $region11: #{actor_forward.1} parent=0 // pred_check_branch
    %17 = sbr.rel (0) target = $region13
  $region12: #{actor_forward.1} parent=0 // pred_region
    _
  $region13: #{actor_forward.1} parent=0 // pred_fallthru
    _
  // Predicated region
  $region14: #{actor_forward.1} parent=0 // pred_check
    _
  $region15: #{actor_forward.1} parent=0 // pred_check_branch
    %19 = sbr.rel (0) target = $region17
  $region16: #{actor_forward.1} parent=0 // pred_region
    _
  $region17: #{actor_forward.1} parent=0 // pred_fallthru
    _
  // Predicated region
  $region18: #{actor_forward.1} parent=0 // pred_check
    _
  $region19: #{actor_forward.1} parent=0 // pred_check_branch
    %21 = sbr.rel (0) target = $region21
  $region20: #{actor_forward.1} parent=0 // pred_region
    _
  $region21: #{actor_forward.1} parent=0 // pred_fallthru
    _
  // Predicated region
  $region22: #{actor_forward.1} parent=0 // pred_check
    _
  $region23: #{actor_forward.1} parent=0 // pred_check_branch
    %23 = sbr.rel (0) target = $region25
  $region24: #{actor_forward.1} parent=0 // pred_region
    _
  $region25: #{actor_forward.1} parent=0 // pred_fallthru
    _
  // Predicated region
  $region26: #{actor_forward.1} parent=0 // pred_check
    _
  $region27: #{actor_forward.1} parent=0 // pred_check_branch
    %25 = sbr.rel (0) target = $region29
  $region28: #{actor_forward.1} parent=0 // pred_region
    _
  $region29: #{actor_forward.1} parent=0 // pred_fallthru
    _
  %v27 = vld [vmem:[%s0] sm:$0xff]
  %v28 = vpack.c.bf16 %v27, %v27
  %v29 = vld [vmem:[%s1] sm:$0xff]
  %v30 = vld [vmem:[%s1 + $0x8] sm:$0xff]
  %v31 = vld [vmem:[%s1 + $0x10] sm:$0xff]
  %v32 = vld [vmem:[%s1 + $0x18] sm:$0xf]
  %v33 = vld [vmem:[%s1 + $0x1c] sm:$0xff]
  %v34 = vld [vmem:[%s1 + $0x24] sm:$0xff]
  %v35 = vld [vmem:[%s1 + $0x2c] sm:$0xff]
  %v36 = vld [vmem:[%s1 + $0x34] sm:$0xf]
  %v37 = vld [vmem:[%s1 + $0x38] sm:$0xff]
  %v38 = vld [vmem:[%s1 + $0x40] sm:$0xff]
  %v39 = vld [vmem:[%s1 + $0x48] sm:$0xff]
  %v40 = vld [vmem:[%s1 + $0x50] sm:$0xf]
  %v41 = vld [vmem:[%s2] sm:$0x7f]
  %v43 = vlaneseq
  %v44 = vshrl.u32 %v43, 7
  %v45 = vsub.s32 0, %v44
  %v46 = vrot.slane %v41, %v45
  %v47 = vlaneseq
  %v48 = vshrl.u32 %v47, 7
  %v49 = vsub.s32 1, %v48
  %v50 = vrot.slane %v41, %v49
  %v51 = vlaneseq
  %v52 = vshrl.u32 %v51, 7
  %v53 = vsub.s32 2, %v52
  %v54 = vrot.slane %v41, %v53
  %v55 = vlaneseq
  %v56 = vshrl.u32 %v55, 7
  %v57 = vsub.s32 3, %v56
  %v58 = vrot.slane %v41, %v57
  %v59 = vlaneseq
  %v60 = vshrl.u32 %v59, 7
  %v61 = vsub.s32 4, %v60
  %v62 = vrot.slane %v41, %v61
  %v63 = vlaneseq
  %v64 = vshrl.u32 %v63, 7
  %v65 = vsub.s32 5, %v64
  %v66 = vrot.slane %v41, %v65
  %v67 = vlaneseq
  %v68 = vshrl.u32 %v67, 7
  %v69 = vsub.s32 6, %v68
  %v70 = vrot.slane %v41, %v69
  %v90 = vunpack.c.l.b16 %v29
  %v91 = vunpack.c.h.b16 %v29
  %v92 = vunpack.c.l.b16 %v30
  %v93 = vunpack.c.h.b16 %v30
  %v94 = vunpack.c.l.b16 %v31
  %v95 = vunpack.c.h.b16 %v31
  %v96 = vunpack.c.l.b16 %v32
  %v97 = vunpack.c.l.b16 %v33
  %v98 = vunpack.c.h.b16 %v33
  %v99 = vunpack.c.l.b16 %v34
  %v100 = vunpack.c.h.b16 %v34
  %v101 = vunpack.c.l.b16 %v35
  %v102 = vunpack.c.h.b16 %v35
  %v103 = vunpack.c.l.b16 %v36
  %v104 = vunpack.c.l.b16 %v37
  %v105 = vunpack.c.h.b16 %v37
  %v106 = vunpack.c.l.b16 %v38
  %v107 = vunpack.c.h.b16 %v38
  %v108 = vunpack.c.l.b16 %v39
  %v109 = vunpack.c.h.b16 %v39
  %v110 = vunpack.c.l.b16 %v40
  %v111 = vpack.c.b16 %v97, %v90
  %v112 = vpack.c.b16 %v98, %v91
  %v113 = vpack.c.b16 %v99, %v92
  %v114 = vpack.c.b16 %v100, %v93
  %v115 = vpack.c.b16 %v101, %v94
  %v116 = vpack.c.b16 %v102, %v95
  %v117 = vpack.c.b16 %v103, %v96
  %v118 = vpack.c.b16 %v104, %v104
  %v119 = vpack.c.b16 %v105, %v105
  %v120 = vpack.c.b16 %v106, %v106
  %v121 = vpack.c.b16 %v107, %v107
  %v122 = vpack.c.b16 %v108, %v108
  %v123 = vpack.c.b16 %v109, %v109
  %v124 = vpack.c.b16 %v110, %v110
  %vm132 = vcmask 195584
  %v134 = vsel %vm132, %v28, 0
  %vm136 = vcmask 1043456
  %v138 = vsel %vm136, %v118, 0
  %v141 = vsel %vm136, %v119, 0
  %v144 = vsel %vm136, %v120, 0
  %v147 = vsel %vm136, %v121, 0
  %v150 = vsel %vm136, %v122, 0
  %v153 = vsel %vm136, %v123, 0
  %v156 = vsel %vm136, %v124, 0
  %158 = vmatprep.subr.bf16.mxu0 %v112
  %159 = vmatpush1.bf16.msra.mxu0 %v111
  %160 = vmatprep.subr.bf16.mxu0 %v141
  %161 = vmatpush1.bf16.msra.mxu0 %v138
  %162 = vmatprep.subr.bf16.mxu0 0
  %163 = vmatpush1.bf16.msra.mxu0 0
  %164 = vmatprep.subr.bf16.mxu0 0
  %165 = vmatpush1.bf16.msra.mxu0 0
  %166 = vmatprep.subr.bf16.mxu0 0
  %167 = vmatpush1.bf16.msra.mxu0 0
  %168 = vmatprep.subr.bf16.mxu0 0
  %169 = vmatpush1.bf16.msra.mxu0 0
  %170 = vmatprep.subr.bf16.mxu0 0
  %171 = vmatpush1.bf16.msra.mxu0 0
  %172 = vmatprep.subr.bf16.mxu0 0
  %173 = vmatpush1.bf16.msra.mxu0 0
  %174 = vmatprep.subr.bf16.mxu0 0
  %175 = vmatpush1.bf16.msra.mxu0 0
  %176 = vmatprep.subr.bf16.mxu0 0
  %177 = vmatpush1.bf16.msra.mxu0 0
  %178 = vmatprep.subr.bf16.mxu0 0
  %179 = vmatpush1.bf16.msra.mxu0 0
  %180 = vmatprep.subr.bf16.mxu0 0
  %181 = vmatpush1.bf16.msra.mxu0 0
  %182 = vmatprep.subr.bf16.mxu0 0
  %183 = vmatpush1.bf16.msra.mxu0 0
  %184 = vmatprep.subr.bf16.mxu0 0
  %185 = vmatpush1.bf16.msra.mxu0 0
  %186 = vmatprep.subr.bf16.mxu0 0
  %187 = vmatpush1.bf16.msra.mxu0 0
  %188 = vmatprep.subr.bf16.mxu0 0
  %189 = vmatpush1.bf16.msra.mxu0 0
  %190 = vmatprep.mubr.bf16.mxu0 0
  %191 = vmatmul.mubr.bf16.gmra.mrb[0].mxu0 %v134
  %v192 = vpop.f32.mrb[0].mxu0
  %v193 = vadd.f32 %v46, %v192
  %v194 = vpop.f32.mrb[0].mxu0
  %v195 = vadd.f32 %v50, %v194
  %v196 = vpop.f32.mrb[0].mxu0
  %v197 = vpop.f32.mrb[0].mxu0
  %198 = vdwg.mxu0
  %199 = vmatprep.subr.bf16.mxu0 %v114
  %200 = vmatpush1.bf16.msra.mxu0 %v113
  %201 = vmatprep.subr.bf16.mxu0 %v147
  %202 = vmatpush1.bf16.msra.mxu0 %v144
  %203 = vmatprep.subr.bf16.mxu0 0
  %204 = vmatpush1.bf16.msra.mxu0 0
  %205 = vmatprep.subr.bf16.mxu0 0
  %206 = vmatpush1.bf16.msra.mxu0 0
  %207 = vmatprep.subr.bf16.mxu0 0
  %208 = vmatpush1.bf16.msra.mxu0 0
  %209 = vmatprep.subr.bf16.mxu0 0
  %210 = vmatpush1.bf16.msra.mxu0 0
  %211 = vmatprep.subr.bf16.mxu0 0
  %212 = vmatpush1.bf16.msra.mxu0 0
  %213 = vmatprep.subr.bf16.mxu0 0
  %214 = vmatpush1.bf16.msra.mxu0 0
  %215 = vmatprep.subr.bf16.mxu0 0
  %216 = vmatpush1.bf16.msra.mxu0 0
  %217 = vmatprep.subr.bf16.mxu0 0
  %218 = vmatpush1.bf16.msra.mxu0 0
  %219 = vmatprep.subr.bf16.mxu0 0
  %220 = vmatpush1.bf16.msra.mxu0 0
  %221 = vmatprep.subr.bf16.mxu0 0
  %222 = vmatpush1.bf16.msra.mxu0 0
  %223 = vmatprep.subr.bf16.mxu0 0
  %224 = vmatpush1.bf16.msra.mxu0 0
  %225 = vmatprep.subr.bf16.mxu0 0
  %226 = vmatpush1.bf16.msra.mxu0 0
  %227 = vmatprep.subr.bf16.mxu0 0
  %228 = vmatpush1.bf16.msra.mxu0 0
  %229 = vmatprep.subr.bf16.mxu0 0
  %230 = vmatpush1.bf16.msra.mxu0 0
  %231 = vmatprep.mubr.bf16.mxu0 0
  %232 = vmatmul.mubr.bf16.gmra.mrb[0].mxu0 %v134
  %v233 = vpop.f32.mrb[0].mxu0
  %v234 = vadd.f32 %v54, %v233
  %v235 = vpop.f32.mrb[0].mxu0
  %v236 = vadd.f32 %v58, %v235
  %v237 = vpop.f32.mrb[0].mxu0
  %v238 = vpop.f32.mrb[0].mxu0
  %239 = vdwg.mxu0
  %240 = vmatprep.subr.bf16.mxu0 %v116
  %241 = vmatpush1.bf16.msra.mxu0 %v115
  %242 = vmatprep.subr.bf16.mxu0 %v153
  %243 = vmatpush1.bf16.msra.mxu0 %v150
  %244 = vmatprep.subr.bf16.mxu0 0
  %245 = vmatpush1.bf16.msra.mxu0 0
  %246 = vmatprep.subr.bf16.mxu0 0
  %247 = vmatpush1.bf16.msra.mxu0 0
  %248 = vmatprep.subr.bf16.mxu0 0
  %249 = vmatpush1.bf16.msra.mxu0 0
  %250 = vmatprep.subr.bf16.mxu0 0
  %251 = vmatpush1.bf16.msra.mxu0 0
  %252 = vmatprep.subr.bf16.mxu0 0
  %253 = vmatpush1.bf16.msra.mxu0 0
  %254 = vmatprep.subr.bf16.mxu0 0
  %255 = vmatpush1.bf16.msra.mxu0 0
  %256 = vmatprep.subr.bf16.mxu0 0
  %257 = vmatpush1.bf16.msra.mxu0 0
  %258 = vmatprep.subr.bf16.mxu0 0
  %259 = vmatpush1.bf16.msra.mxu0 0
  %260 = vmatprep.subr.bf16.mxu0 0
  %261 = vmatpush1.bf16.msra.mxu0 0
  %262 = vmatprep.subr.bf16.mxu0 0
  %263 = vmatpush1.bf16.msra.mxu0 0
  %264 = vmatprep.subr.bf16.mxu0 0
  %265 = vmatpush1.bf16.msra.mxu0 0
  %266 = vmatprep.subr.bf16.mxu0 0
  %267 = vmatpush1.bf16.msra.mxu0 0
  %268 = vmatprep.subr.bf16.mxu0 0
  %269 = vmatpush1.bf16.msra.mxu0 0
  %270 = vmatprep.subr.bf16.mxu0 0
  %271 = vmatpush1.bf16.msra.mxu0 0
  %272 = vmatprep.mubr.bf16.mxu0 0
  %273 = vmatmul.mubr.bf16.gmra.mrb[0].mxu0 %v134
  %v274 = vpop.f32.mrb[0].mxu0
  %v275 = vadd.f32 %v62, %v274
  %v276 = vpop.f32.mrb[0].mxu0
  %v277 = vadd.f32 %v66, %v276
  %v278 = vpop.f32.mrb[0].mxu0
  %v279 = vpop.f32.mrb[0].mxu0
  %280 = vdwg.mxu0
  %281 = vmatprep.subr.bf16.mxu0 0
  %282 = vmatpush1.bf16.msra.mxu0 %v117
  %283 = vmatprep.subr.bf16.mxu0 0
  %284 = vmatpush1.bf16.msra.mxu0 %v156
  %285 = vmatprep.subr.bf16.mxu0 0
  %286 = vmatpush1.bf16.msra.mxu0 0
  %287 = vmatprep.subr.bf16.mxu0 0
  %288 = vmatpush1.bf16.msra.mxu0 0
  %289 = vmatprep.subr.bf16.mxu0 0
  %290 = vmatpush1.bf16.msra.mxu0 0
  %291 = vmatprep.subr.bf16.mxu0 0
  %292 = vmatpush1.bf16.msra.mxu0 0
  %293 = vmatprep.subr.bf16.mxu0 0
  %294 = vmatpush1.bf16.msra.mxu0 0
  %295 = vmatprep.subr.bf16.mxu0 0
  %296 = vmatpush1.bf16.msra.mxu0 0
  %297 = vmatprep.subr.bf16.mxu0 0
  %298 = vmatpush1.bf16.msra.mxu0 0
  %299 = vmatprep.subr.bf16.mxu0 0
  %300 = vmatpush1.bf16.msra.mxu0 0
  %301 = vmatprep.subr.bf16.mxu0 0
  %302 = vmatpush1.bf16.msra.mxu0 0
  %303 = vmatprep.subr.bf16.mxu0 0
  %304 = vmatpush1.bf16.msra.mxu0 0
  %305 = vmatprep.subr.bf16.mxu0 0
  %306 = vmatpush1.bf16.msra.mxu0 0
  %307 = vmatprep.subr.bf16.mxu0 0
  %308 = vmatpush1.bf16.msra.mxu0 0
  %309 = vmatprep.subr.bf16.mxu0 0
  %310 = vmatpush1.bf16.msra.mxu0 0
  %311 = vmatprep.subr.bf16.mxu0 0
  %312 = vmatpush1.bf16.msra.mxu0 0
  %313 = vmatprep.mubr.bf16.mxu0 0
  %314 = vmatmul.mubr.bf16.gmra.mrb[0].mxu0 %v134
  %v315 = vpop.f32.mrb[0].mxu0
  %v316 = vadd.f32 %v70, %v315
  %v317 = vpop.f32.mrb[0].mxu0
  %v318 = vpop.f32.mrb[0].mxu0
  %v319 = vpop.f32.mrb[0].mxu0
  %320 = vdwg.mxu0
  %v321 = vmax.f32 %v193, 0.0
  %v322 = vmax.f32 %v195, 0.0
  %v323 = vmax.f32 %v234, 0.0
  %v324 = vmax.f32 %v236, 0.0
  %v325 = vmax.f32 %v275, 0.0
  %v326 = vmax.f32 %v277, 0.0
  %v327 = vmax.f32 %v316, 0.0
  %v328 = vpack.c.bf16 %v321, %v321
  %v329 = vpack.c.bf16 %v322, %v322
  %v330 = vpack.c.bf16 %v323, %v323
  %v331 = vpack.c.bf16 %v324, %v324
  %v332 = vpack.c.bf16 %v325, %v325
  %v333 = vpack.c.bf16 %v326, %v326
  %v334 = vpack.c.bf16 %v327, %v327
  %v335 = vld [vmem:[%s3] sm:$0xff]
  %v336 = vld [vmem:[%s3 + $0x8] sm:$0xff]
  %v337 = vld [vmem:[%s3 + $0x10] sm:$0xf]
  %v338 = vld [vmem:[%s3 + $0x14] sm:$0xff]
  %v339 = vld [vmem:[%s3 + $0x1c] sm:$0xff]
  %v340 = vld [vmem:[%s3 + $0x24] sm:$0xf]
  %v341 = vld [vmem:[%s3 + $0x28] sm:$0xff]
  %v342 = vld [vmem:[%s3 + $0x30] sm:$0xff]
  %v343 = vld [vmem:[%s3 + $0x38] sm:$0xf]
  %v344 = vld [vmem:[%s3 + $0x3c] sm:$0xff]
  %v345 = vld [vmem:[%s3 + $0x44] sm:$0xff]
  %v346 = vld [vmem:[%s3 + $0x4c] sm:$0xf]
  %v347 = vld [vmem:[%s3 + $0x50] sm:$0xff]
  %v348 = vld [vmem:[%s3 + $0x58] sm:$0xff]
  %v349 = vld [vmem:[%s3 + $0x60] sm:$0xf]
  %v350 = vld [vmem:[%s3 + $0x64] sm:$0xff]
  %v351 = vld [vmem:[%s3 + $0x6c] sm:$0xff]
  %v352 = vld [vmem:[%s3 + $0x74] sm:$0xf]
  %v353 = vld [vmem:[%s3 + $0x78] sm:$0xff]
  %v354 = vld [vmem:[%s3 + $0x80] sm:$0xff]
  %v355 = vld [vmem:[%s3 + $0x88] sm:$0xf]
  %v356 = vld [vmem:[%s3 + $0x8c] sm:$0xff]
  %v357 = vld [vmem:[%s3 + $0x94] sm:$0xff]
  %v358 = vld [vmem:[%s3 + $0x9c] sm:$0xf]
  %v359 = vld [vmem:[%s3 + $0xa0] sm:$0xff]
  %v360 = vld [vmem:[%s3 + $0xa8] sm:$0xff]
  %v361 = vld [vmem:[%s3 + $0xb0] sm:$0xf]
  %v362 = vld [vmem:[%s3 + $0xb4] sm:$0xff]
  %v363 = vld [vmem:[%s3 + $0xbc] sm:$0xff]
  %v364 = vld [vmem:[%s3 + $0xc4] sm:$0xf]
  %v365 = vld [vmem:[%s3 + $0xc8] sm:$0xff]
  %v366 = vld [vmem:[%s3 + $0xd0] sm:$0xff]
  %v367 = vld [vmem:[%s3 + $0xd8] sm:$0xf]
  %v368 = vld [vmem:[%s3 + $0xdc] sm:$0xff]
  %v369 = vld [vmem:[%s3 + $0xe4] sm:$0xff]
  %v370 = vld [vmem:[%s3 + $0xec] sm:$0xf]
  %v371 = vld [vmem:[%s3 + $0xf0] sm:$0xff]
  %v372 = vld [vmem:[%s3 + $0xf8] sm:$0xff]
  %v373 = vld [vmem:[%s3 + $0x100] sm:$0xf]
  %v374 = vld [vmem:[%s3 + $0x104] sm:$0xff]
  %v375 = vld [vmem:[%s3 + $0x10c] sm:$0xff]
  %v376 = vld [vmem:[%s3 + $0x114] sm:$0xf]
  %v377 = vld [vmem:[%s3 + $0x118] sm:$0xff]
  %v378 = vld [vmem:[%s3 + $0x120] sm:$0xff]
  %v379 = vld [vmem:[%s3 + $0x128] sm:$0xf]
  %v380 = vld [vmem:[%s3 + $0x12c] sm:$0xff]
  %v381 = vld [vmem:[%s3 + $0x134] sm:$0xff]
  %v382 = vld [vmem:[%s3 + $0x13c] sm:$0xf]
  %v383 = vld [vmem:[%s3 + $0x140] sm:$0xff]
  %v384 = vld [vmem:[%s3 + $0x148] sm:$0xff]
  %v385 = vld [vmem:[%s3 + $0x150] sm:$0xf]
  %v386 = vld [vmem:[%s3 + $0x154] sm:$0xff]
  %v387 = vld [vmem:[%s3 + $0x15c] sm:$0xff]
  %v388 = vld [vmem:[%s3 + $0x164] sm:$0xf]
  %v389 = vld [vmem:[%s3 + $0x168] sm:$0xff]
  %v390 = vld [vmem:[%s3 + $0x170] sm:$0xff]
  %v391 = vld [vmem:[%s3 + $0x178] sm:$0xf]
  %v392 = vld [vmem:[%s3 + $0x17c] sm:$0xff]
  %v393 = vld [vmem:[%s3 + $0x184] sm:$0xff]
  %v394 = vld [vmem:[%s3 + $0x18c] sm:$0xf]
  %v395 = vld [vmem:[%s3 + $0x190] sm:$0xff]
  %v396 = vld [vmem:[%s3 + $0x198] sm:$0xff]
  %v397 = vld [vmem:[%s3 + $0x1a0] sm:$0xf]
  %v398 = vld [vmem:[%s3 + $0x1a4] sm:$0xff]
  %v399 = vld [vmem:[%s3 + $0x1ac] sm:$0xff]
  %v400 = vld [vmem:[%s3 + $0x1b4] sm:$0xf]
  %v401 = vld [vmem:[%s3 + $0x1b8] sm:$0xff]
  %v402 = vld [vmem:[%s3 + $0x1c0] sm:$0xff]
  %v403 = vld [vmem:[%s3 + $0x1c8] sm:$0xf]
  %v404 = vld [vmem:[%s3 + $0x1cc] sm:$0xff]
  %v405 = vld [vmem:[%s3 + $0x1d4] sm:$0xff]
  %v406 = vld [vmem:[%s3 + $0x1dc] sm:$0xf]
  %v407 = vld [vmem:[%s3 + $0x1e0] sm:$0xff]
  %v408 = vld [vmem:[%s3 + $0x1e8] sm:$0xff]
  %v409 = vld [vmem:[%s3 + $0x1f0] sm:$0xf]
  %v410 = vld [vmem:[%s3 + $0x1f4] sm:$0xff]
  %v411 = vld [vmem:[%s3 + $0x1fc] sm:$0xff]
  %v412 = vld [vmem:[%s3 + $0x204] sm:$0xf]
  %v413 = vld [vmem:[%s3 + $0x208] sm:$0xff]
  %v414 = vld [vmem:[%s3 + $0x210] sm:$0xff]
  %v415 = vld [vmem:[%s3 + $0x218] sm:$0xf]
  %v416 = vld [vmem:[%s3 + $0x21c] sm:$0xff]
  %v417 = vld [vmem:[%s3 + $0x224] sm:$0xff]
  %v418 = vld [vmem:[%s3 + $0x22c] sm:$0xf]
  %v419 = vld [vmem:[%s3 + $0x230] sm:$0xff]
  %v420 = vld [vmem:[%s3 + $0x238] sm:$0xff]
  %v421 = vld [vmem:[%s3 + $0x240] sm:$0xf]
  %v422 = vld [vmem:[%s3 + $0x244] sm:$0xff]
  %v423 = vld [vmem:[%s3 + $0x24c] sm:$0xff]
  %v424 = vld [vmem:[%s3 + $0x254] sm:$0xf]
  %v425 = vld [vmem:[%s3 + $0x258] sm:$0xff]
  %v426 = vld [vmem:[%s3 + $0x260] sm:$0xff]
  %v427 = vld [vmem:[%s3 + $0x268] sm:$0xf]
  %v428 = vld [vmem:[%s3 + $0x26c] sm:$0xff]
  %v429 = vld [vmem:[%s3 + $0x274] sm:$0xff]
  %v430 = vld [vmem:[%s3 + $0x27c] sm:$0xf]
  %v431 = vld [vmem:[%s3 + $0x280] sm:$0xff]
  %v432 = vld [vmem:[%s3 + $0x288] sm:$0xff]
  %v433 = vld [vmem:[%s3 + $0x290] sm:$0xf]
  %v434 = vld [vmem:[%s3 + $0x294] sm:$0xff]
  %v435 = vld [vmem:[%s3 + $0x29c] sm:$0xff]
  %v436 = vld [vmem:[%s3 + $0x2a4] sm:$0xf]
  %v437 = vld [vmem:[%s3 + $0x2a8] sm:$0xff]
  %v438 = vld [vmem:[%s3 + $0x2b0] sm:$0xff]
  %v439 = vld [vmem:[%s3 + $0x2b8] sm:$0xf]
  %v440 = vld [vmem:[%s3 + $0x2bc] sm:$0xff]
  %v441 = vld [vmem:[%s3 + $0x2c4] sm:$0xff]
  %v442 = vld [vmem:[%s3 + $0x2cc] sm:$0xf]
  %v443 = vld [vmem:[%s3 + $0x2d0] sm:$0xff]
  %v444 = vld [vmem:[%s3 + $0x2d8] sm:$0xff]
  %v445 = vld [vmem:[%s3 + $0x2e0] sm:$0xf]
  %v446 = vld [vmem:[%s3 + $0x2e4] sm:$0xff]
  %v447 = vld [vmem:[%s3 + $0x2ec] sm:$0xff]
  %v448 = vld [vmem:[%s3 + $0x2f4] sm:$0xf]
  %v449 = vld [vmem:[%s3 + $0x2f8] sm:$0xff]
  %v450 = vld [vmem:[%s3 + $0x300] sm:$0xff]
  %v451 = vld [vmem:[%s3 + $0x308] sm:$0xf]
  %v452 = vld [vmem:[%s3 + $0x30c] sm:$0xff]
  %v453 = vld [vmem:[%s3 + $0x314] sm:$0xff]
  %v454 = vld [vmem:[%s3 + $0x31c] sm:$0xf]
  %v455 = vld [vmem:[%s3 + $0x320] sm:$0xff]
  %v456 = vld [vmem:[%s3 + $0x328] sm:$0xff]
  %v457 = vld [vmem:[%s3 + $0x330] sm:$0xf]
  %v458 = vld [vmem:[%s3 + $0x334] sm:$0xff]
  %v459 = vld [vmem:[%s3 + $0x33c] sm:$0xff]
  %v460 = vld [vmem:[%s3 + $0x344] sm:$0xf]
  %v461 = vld [vmem:[%s3 + $0x348] sm:$0xff]
  %v462 = vld [vmem:[%s3 + $0x350] sm:$0xff]
  %v463 = vld [vmem:[%s3 + $0x358] sm:$0xf]
  %v464 = vld [vmem:[%s3 + $0x35c] sm:$0xff]
  %v465 = vld [vmem:[%s3 + $0x364] sm:$0xff]
  %v466 = vld [vmem:[%s3 + $0x36c] sm:$0xf]
  %v467 = vld [vmem:[%s3 + $0x370] sm:$0xff]
  %v468 = vld [vmem:[%s3 + $0x378] sm:$0xff]
  %v469 = vld [vmem:[%s3 + $0x380] sm:$0xf]
  %v470 = vld [vmem:[%s3 + $0x384] sm:$0xff]
  %v471 = vld [vmem:[%s3 + $0x38c] sm:$0xff]
  %v472 = vld [vmem:[%s3 + $0x394] sm:$0xf]
  %v473 = vld [vmem:[%s3 + $0x398] sm:$0xff]
  %v474 = vld [vmem:[%s3 + $0x3a0] sm:$0xff]
  %v475 = vld [vmem:[%s3 + $0x3a8] sm:$0xf]
  %v476 = vld [vmem:[%s3 + $0x3ac] sm:$0xff]
  %v477 = vld [vmem:[%s3 + $0x3b4] sm:$0xff]
  %v478 = vld [vmem:[%s3 + $0x3bc] sm:$0xf]
  %v479 = vld [vmem:[%s3 + $0x3c0] sm:$0xff]
  %v480 = vld [vmem:[%s3 + $0x3c8] sm:$0xff]
  %v481 = vld [vmem:[%s3 + $0x3d0] sm:$0xf]
  %v482 = vld [vmem:[%s3 + $0x3d4] sm:$0xff]
  %v483 = vld [vmem:[%s3 + $0x3dc] sm:$0xff]
  %v484 = vld [vmem:[%s3 + $0x3e4] sm:$0xf]
  %v485 = vld [vmem:[%s3 + $0x3e8] sm:$0xff]
  %v486 = vld [vmem:[%s3 + $0x3f0] sm:$0xff]
  %v487 = vld [vmem:[%s3 + $0x3f8] sm:$0xf]
  %v488 = vld [vmem:[%s3 + $0x3fc] sm:$0xff]
  %v489 = vld [vmem:[%s3 + $0x404] sm:$0xff]
  %v490 = vld [vmem:[%s3 + $0x40c] sm:$0xf]
  %v491 = vld [vmem:[%s3 + $0x410] sm:$0xff]
  %v492 = vld [vmem:[%s3 + $0x418] sm:$0xff]
  %v493 = vld [vmem:[%s3 + $0x420] sm:$0xf]
  %v494 = vld [vmem:[%s3 + $0x424] sm:$0xff]
  %v495 = vld [vmem:[%s3 + $0x42c] sm:$0xff]
  %v496 = vld [vmem:[%s3 + $0x434] sm:$0xf]
  %v497 = vld [vmem:[%s3 + $0x438] sm:$0xff]
  %v498 = vld [vmem:[%s3 + $0x440] sm:$0xff]
  %v499 = vld [vmem:[%s3 + $0x448] sm:$0xf]
  %v500 = vld [vmem:[%s3 + $0x44c] sm:$0xff]
  %v501 = vld [vmem:[%s3 + $0x454] sm:$0xff]
  %v502 = vld [vmem:[%s3 + $0x45c] sm:$0xf]
  %v503 = vld [vmem:[%s3 + $0x460] sm:$0xff]
  %v504 = vld [vmem:[%s3 + $0x468] sm:$0xff]
  %v505 = vld [vmem:[%s3 + $0x470] sm:$0xf]
  %v506 = vld [vmem:[%s3 + $0x474] sm:$0xff]
  %v507 = vld [vmem:[%s3 + $0x47c] sm:$0xff]
  %v508 = vld [vmem:[%s3 + $0x484] sm:$0xf]
  %v509 = vld [vmem:[%s3 + $0x488] sm:$0xff]
  %v510 = vld [vmem:[%s3 + $0x490] sm:$0xff]
  %v511 = vld [vmem:[%s3 + $0x498] sm:$0xf]
  %v512 = vld [vmem:[%s3 + $0x49c] sm:$0xff]
  %v513 = vld [vmem:[%s3 + $0x4a4] sm:$0xff]
  %v514 = vld [vmem:[%s3 + $0x4ac] sm:$0xf]
  %v515 = vld [vmem:[%s3 + $0x4b0] sm:$0xff]
  %v516 = vld [vmem:[%s3 + $0x4b8] sm:$0xff]
  %v517 = vld [vmem:[%s3 + $0x4c0] sm:$0xf]
  %v518 = vld [vmem:[%s3 + $0x4c4] sm:$0xff]
  %v519 = vld [vmem:[%s3 + $0x4cc] sm:$0xff]
  %v520 = vld [vmem:[%s3 + $0x4d4] sm:$0xf]
  %v521 = vld [vmem:[%s3 + $0x4d8] sm:$0xff]
  %v522 = vld [vmem:[%s3 + $0x4e0] sm:$0xff]
  %v523 = vld [vmem:[%s3 + $0x4e8] sm:$0xf]
  %v524 = vld [vmem:[%s3 + $0x4ec] sm:$0xff]
  %v525 = vld [vmem:[%s3 + $0x4f4] sm:$0xff]
  %v526 = vld [vmem:[%s3 + $0x4fc] sm:$0xf]
  %v527 = vld [vmem:[%s3 + $0x500] sm:$0xff]
  %v528 = vld [vmem:[%s3 + $0x508] sm:$0xff]
  %v529 = vld [vmem:[%s3 + $0x510] sm:$0xf]
  %v530 = vld [vmem:[%s3 + $0x514] sm:$0xff]
  %v531 = vld [vmem:[%s3 + $0x51c] sm:$0xff]
  %v532 = vld [vmem:[%s3 + $0x524] sm:$0xf]
  %v533 = vld [vmem:[%s3 + $0x528] sm:$0xff]
  %v534 = vld [vmem:[%s3 + $0x530] sm:$0xff]
  %v535 = vld [vmem:[%s3 + $0x538] sm:$0xf]
  %v536 = vld [vmem:[%s3 + $0x53c] sm:$0xff]
  %v537 = vld [vmem:[%s3 + $0x544] sm:$0xff]
  %v538 = vld [vmem:[%s3 + $0x54c] sm:$0xf]
  %v539 = vld [vmem:[%s3 + $0x550] sm:$0xff]
  %v540 = vld [vmem:[%s3 + $0x558] sm:$0xff]
  %v541 = vld [vmem:[%s3 + $0x560] sm:$0xf]
  %v542 = vld [vmem:[%s3 + $0x564] sm:$0xff]
  %v543 = vld [vmem:[%s3 + $0x56c] sm:$0xff]
  %v544 = vld [vmem:[%s3 + $0x574] sm:$0xf]
  %v545 = vld [vmem:[%s3 + $0x578] sm:$0xff]
  %v546 = vld [vmem:[%s3 + $0x580] sm:$0xff]
  %v547 = vld [vmem:[%s3 + $0x588] sm:$0xf]
  %v548 = vld [vmem:[%s3 + $0x58c] sm:$0xff]
  %v549 = vld [vmem:[%s3 + $0x594] sm:$0xff]
  %v550 = vld [vmem:[%s3 + $0x59c] sm:$0xf]
  %v551 = vld [vmem:[%s3 + $0x5a0] sm:$0xff]
  %v552 = vld [vmem:[%s3 + $0x5a8] sm:$0xff]
  %v553 = vld [vmem:[%s3 + $0x5b0] sm:$0xf]
  %v554 = vld [vmem:[%s3 + $0x5b4] sm:$0xff]
  %v555 = vld [vmem:[%s3 + $0x5bc] sm:$0xff]
  %v556 = vld [vmem:[%s3 + $0x5c4] sm:$0xf]
  %v557 = vld [vmem:[%s3 + $0x5c8] sm:$0xff]
  %v558 = vld [vmem:[%s3 + $0x5d0] sm:$0xff]
  %v559 = vld [vmem:[%s3 + $0x5d8] sm:$0xf]
  %v560 = vld [vmem:[%s3 + $0x5dc] sm:$0xff]
  %v561 = vld [vmem:[%s3 + $0x5e4] sm:$0xff]
  %v562 = vld [vmem:[%s3 + $0x5ec] sm:$0xf]
  %v563 = vld [vmem:[%s3 + $0x5f0] sm:$0xff]
  %v564 = vld [vmem:[%s3 + $0x5f8] sm:$0xff]
  %v565 = vld [vmem:[%s3 + $0x600] sm:$0xf]
  %v566 = vld [vmem:[%s3 + $0x604] sm:$0xff]
  %v567 = vld [vmem:[%s3 + $0x60c] sm:$0xff]
  %v568 = vld [vmem:[%s3 + $0x614] sm:$0xf]
  %v569 = vld [vmem:[%s3 + $0x618] sm:$0xff]
  %v570 = vld [vmem:[%s3 + $0x620] sm:$0xff]
  %v571 = vld [vmem:[%s3 + $0x628] sm:$0xf]
  %v572 = vld [vmem:[%s3 + $0x62c] sm:$0xff]
  %v573 = vld [vmem:[%s3 + $0x634] sm:$0xff]
  %v574 = vld [vmem:[%s3 + $0x63c] sm:$0xf]
  %v575 = vld [vmem:[%s3 + $0x640] sm:$0xff]
  %v576 = vld [vmem:[%s3 + $0x648] sm:$0xff]
  %v577 = vld [vmem:[%s3 + $0x650] sm:$0xf]
  %v578 = vld [vmem:[%s3 + $0x654] sm:$0xff]
  %v579 = vld [vmem:[%s3 + $0x65c] sm:$0xff]
  %v580 = vld [vmem:[%s3 + $0x664] sm:$0xf]
  %v581 = vld [vmem:[%s3 + $0x668] sm:$0xff]
  %v582 = vld [vmem:[%s3 + $0x670] sm:$0xff]
  %v583 = vld [vmem:[%s3 + $0x678] sm:$0xf]
  %v584 = vld [vmem:[%s3 + $0x67c] sm:$0xff]
  %v585 = vld [vmem:[%s3 + $0x684] sm:$0xff]
  %v586 = vld [vmem:[%s3 + $0x68c] sm:$0xf]
  %v587 = vld [vmem:[%s3 + $0x690] sm:$0xff]
  %v588 = vld [vmem:[%s3 + $0x698] sm:$0xff]
  %v589 = vld [vmem:[%s3 + $0x6a0] sm:$0xf]
  %v590 = vld [vmem:[%s3 + $0x6a4] sm:$0xff]
  %v591 = vld [vmem:[%s3 + $0x6ac] sm:$0xff]
  %v592 = vld [vmem:[%s3 + $0x6b4] sm:$0xf]
  %v593 = vld [vmem:[%s3 + $0x6b8] sm:$0xff]
  %v594 = vld [vmem:[%s3 + $0x6c0] sm:$0xff]
  %v595 = vld [vmem:[%s3 + $0x6c8] sm:$0xf]
  %v596 = vld [vmem:[%s3 + $0x6cc] sm:$0xff]
  %v597 = vld [vmem:[%s3 + $0x6d4] sm:$0xff]
  %v598 = vld [vmem:[%s3 + $0x6dc] sm:$0xf]
  %v599 = vld [vmem:[%s3 + $0x6e0] sm:$0xff]
  %v600 = vld [vmem:[%s3 + $0x6e8] sm:$0xff]
  %v601 = vld [vmem:[%s3 + $0x6f0] sm:$0xf]
  %v602 = vld [vmem:[%s3 + $0x6f4] sm:$0xff]
  %v603 = vld [vmem:[%s3 + $0x6fc] sm:$0xff]
  %v604 = vld [vmem:[%s3 + $0x704] sm:$0xf]
  %v605 = vld [vmem:[%s3 + $0x708] sm:$0xff]
  %v606 = vld [vmem:[%s3 + $0x710] sm:$0xff]
  %v607 = vld [vmem:[%s3 + $0x718] sm:$0xf]
  %v608 = vld [vmem:[%s3 + $0x71c] sm:$0xff]
  %v609 = vld [vmem:[%s3 + $0x724] sm:$0xff]
  %v610 = vld [vmem:[%s3 + $0x72c] sm:$0xf]
  %v611 = vld [vmem:[%s3 + $0x730] sm:$0xff]
  %v612 = vld [vmem:[%s3 + $0x738] sm:$0xff]
  %v613 = vld [vmem:[%s3 + $0x740] sm:$0xf]
  %v614 = vld [vmem:[%s3 + $0x744] sm:$0xff]
  %v615 = vld [vmem:[%s3 + $0x74c] sm:$0xff]
  %v616 = vld [vmem:[%s3 + $0x754] sm:$0xf]
  %v617 = vld [vmem:[%s3 + $0x758] sm:$0xff]
  %v618 = vld [vmem:[%s3 + $0x760] sm:$0xff]
  %v619 = vld [vmem:[%s3 + $0x768] sm:$0xf]
  %v620 = vld [vmem:[%s3 + $0x76c] sm:$0xff]
  %v621 = vld [vmem:[%s3 + $0x774] sm:$0xff]
  %v622 = vld [vmem:[%s3 + $0x77c] sm:$0xf]
  %v623 = vld [vmem:[%s3 + $0x780] sm:$0xff]
  %v624 = vld [vmem:[%s3 + $0x788] sm:$0xff]
  %v625 = vld [vmem:[%s3 + $0x790] sm:$0xf]
  %v626 = vld [vmem:[%s3 + $0x794] sm:$0xff]
  %v627 = vld [vmem:[%s3 + $0x79c] sm:$0xff]
  %v628 = vld [vmem:[%s3 + $0x7a4] sm:$0xf]
  %v629 = vld [vmem:[%s3 + $0x7a8] sm:$0xff]
  %v630 = vld [vmem:[%s3 + $0x7b0] sm:$0xff]
  %v631 = vld [vmem:[%s3 + $0x7b8] sm:$0xf]
  %v632 = vld [vmem:[%s3 + $0x7bc] sm:$0xff]
  %v633 = vld [vmem:[%s3 + $0x7c4] sm:$0xff]
  %v634 = vld [vmem:[%s3 + $0x7cc] sm:$0xf]
  %v635 = vld [vmem:[%s4] sm:$0x1f]
  %v637 = vlaneseq
  %v638 = vshrl.u32 %v637, 7
  %v639 = vsub.s32 0, %v638
  %v640 = vrot.slane %v635, %v639
  %v641 = vlaneseq
  %v642 = vshrl.u32 %v641, 7
  %v643 = vsub.s32 1, %v642
  %v644 = vrot.slane %v635, %v643
  %v645 = vlaneseq
  %v646 = vshrl.u32 %v645, 7
  %v647 = vsub.s32 2, %v646
  %v648 = vrot.slane %v635, %v647
  %v649 = vlaneseq
  %v650 = vshrl.u32 %v649, 7
  %v651 = vsub.s32 3, %v650
  %v652 = vrot.slane %v635, %v651
  %v653 = vlaneseq
  %v654 = vshrl.u32 %v653, 7
  %v655 = vsub.s32 4, %v654
  %v656 = vrot.slane %v635, %v655
  %v962 = vunpack.c.l.b16 %v335
  %v963 = vunpack.c.h.b16 %v335
  %v964 = vunpack.c.l.b16 %v336
  %v965 = vunpack.c.h.b16 %v336
  %v966 = vunpack.c.l.b16 %v337
  %v967 = vunpack.c.l.b16 %v338
  %v968 = vunpack.c.h.b16 %v338
  %v969 = vunpack.c.l.b16 %v339
  %v970 = vunpack.c.h.b16 %v339
  %v971 = vunpack.c.l.b16 %v340
  %v972 = vunpack.c.l.b16 %v341
  %v973 = vunpack.c.h.b16 %v341
  %v974 = vunpack.c.l.b16 %v342
  %v975 = vunpack.c.h.b16 %v342
  %v976 = vunpack.c.l.b16 %v343
  %v977 = vunpack.c.l.b16 %v344
  %v978 = vunpack.c.h.b16 %v344
  %v979 = vunpack.c.l.b16 %v345
  %v980 = vunpack.c.h.b16 %v345
  %v981 = vunpack.c.l.b16 %v346
  %v982 = vunpack.c.l.b16 %v347
  %v983 = vunpack.c.h.b16 %v347
  %v984 = vunpack.c.l.b16 %v348
  %v985 = vunpack.c.h.b16 %v348
  %v986 = vunpack.c.l.b16 %v349
  %v987 = vunpack.c.l.b16 %v350
  %v988 = vunpack.c.h.b16 %v350
  %v989 = vunpack.c.l.b16 %v351
  %v990 = vunpack.c.h.b16 %v351
  %v991 = vunpack.c.l.b16 %v352
  %v992 = vunpack.c.l.b16 %v353
  %v993 = vunpack.c.h.b16 %v353
  %v994 = vunpack.c.l.b16 %v354
  %v995 = vunpack.c.h.b16 %v354
  %v996 = vunpack.c.l.b16 %v355
  %v997 = vunpack.c.l.b16 %v356
  %v998 = vunpack.c.h.b16 %v356
  %v999 = vunpack.c.l.b16 %v357
  %v1000 = vunpack.c.h.b16 %v357
  %v1001 = vunpack.c.l.b16 %v358
  %v1002 = vunpack.c.l.b16 %v359
  %v1003 = vunpack.c.h.b16 %v359
  %v1004 = vunpack.c.l.b16 %v360
  %v1005 = vunpack.c.h.b16 %v360
  %v1006 = vunpack.c.l.b16 %v361
  %v1007 = vunpack.c.l.b16 %v362
  %v1008 = vunpack.c.h.b16 %v362
  %v1009 = vunpack.c.l.b16 %v363
  %v1010 = vunpack.c.h.b16 %v363
  %v1011 = vunpack.c.l.b16 %v364
  %v1012 = vunpack.c.l.b16 %v365
  %v1013 = vunpack.c.h.b16 %v365
  %v1014 = vunpack.c.l.b16 %v366
  %v1015 = vunpack.c.h.b16 %v366
  %v1016 = vunpack.c.l.b16 %v367
  %v1017 = vunpack.c.l.b16 %v368
  %v1018 = vunpack.c.h.b16 %v368
  %v1019 = vunpack.c.l.b16 %v369
  %v1020 = vunpack.c.h.b16 %v369
  %v1021 = vunpack.c.l.b16 %v370
  %v1022 = vunpack.c.l.b16 %v371
  %v1023 = vunpack.c.h.b16 %v371
  %v1024 = vunpack.c.l.b16 %v372
  %v1025 = vunpack.c.h.b16 %v372
  %v1026 = vunpack.c.l.b16 %v373
  %v1027 = vunpack.c.l.b16 %v374
  %v1028 = vunpack.c.h.b16 %v374
  %v1029 = vunpack.c.l.b16 %v375
  %v1030 = vunpack.c.h.b16 %v375
  %v1031 = vunpack.c.l.b16 %v376
  %v1032 = vunpack.c.l.b16 %v377
  %v1033 = vunpack.c.h.b16 %v377
  %v1034 = vunpack.c.l.b16 %v378
  %v1035 = vunpack.c.h.b16 %v378
  %v1036 = vunpack.c.l.b16 %v379
  %v1037 = vunpack.c.l.b16 %v380
  %v1038 = vunpack.c.h.b16 %v380
  %v1039 = vunpack.c.l.b16 %v381
  %v1040 = vunpack.c.h.b16 %v381
  %v1041 = vunpack.c.l.b16 %v382
  %v1042 = vunpack.c.l.b16 %v383
  %v1043 = vunpack.c.h.b16 %v383
  %v1044 = vunpack.c.l.b16 %v384
  %v1045 = vunpack.c.h.b16 %v384
  %v1046 = vunpack.c.l.b16 %v385
  %v1047 = vunpack.c.l.b16 %v386
  %v1048 = vunpack.c.h.b16 %v386
  %v1049 = vunpack.c.l.b16 %v387
  %v1050 = vunpack.c.h.b16 %v387
  %v1051 = vunpack.c.l.b16 %v388
  %v1052 = vunpack.c.l.b16 %v389
  %v1053 = vunpack.c.h.b16 %v389
  %v1054 = vunpack.c.l.b16 %v390
  %v1055 = vunpack.c.h.b16 %v390
  %v1056 = vunpack.c.l.b16 %v391
  %v1057 = vunpack.c.l.b16 %v392
  %v1058 = vunpack.c.h.b16 %v392
  %v1059 = vunpack.c.l.b16 %v393
  %v1060 = vunpack.c.h.b16 %v393
  %v1061 = vunpack.c.l.b16 %v394
  %v1062 = vunpack.c.l.b16 %v395
  %v1063 = vunpack.c.h.b16 %v395
  %v1064 = vunpack.c.l.b16 %v396
  %v1065 = vunpack.c.h.b16 %v396
  %v1066 = vunpack.c.l.b16 %v397
  %v1067 = vunpack.c.l.b16 %v398
  %v1068 = vunpack.c.h.b16 %v398
  %v1069 = vunpack.c.l.b16 %v399
  %v1070 = vunpack.c.h.b16 %v399
  %v1071 = vunpack.c.l.b16 %v400
  %v1072 = vunpack.c.l.b16 %v401
  %v1073 = vunpack.c.h.b16 %v401
  %v1074 = vunpack.c.l.b16 %v402
  %v1075 = vunpack.c.h.b16 %v402
  %v1076 = vunpack.c.l.b16 %v403
  %v1077 = vunpack.c.l.b16 %v404
  %v1078 = vunpack.c.h.b16 %v404
  %v1079 = vunpack.c.l.b16 %v405
  %v1080 = vunpack.c.h.b16 %v405
  %v1081 = vunpack.c.l.b16 %v406
  %v1082 = vunpack.c.l.b16 %v407
  %v1083 = vunpack.c.h.b16 %v407
  %v1084 = vunpack.c.l.b16 %v408
  %v1085 = vunpack.c.h.b16 %v408
  %v1086 = vunpack.c.l.b16 %v409
  %v1087 = vunpack.c.l.b16 %v410
  %v1088 = vunpack.c.h.b16 %v410
  %v1089 = vunpack.c.l.b16 %v411
  %v1090 = vunpack.c.h.b16 %v411
  %v1091 = vunpack.c.l.b16 %v412
  %v1092 = vunpack.c.l.b16 %v413
  %v1093 = vunpack.c.h.b16 %v413
  %v1094 = vunpack.c.l.b16 %v414
  %v1095 = vunpack.c.h.b16 %v414
  %v1096 = vunpack.c.l.b16 %v415
  %v1097 = vunpack.c.l.b16 %v416
  %v1098 = vunpack.c.h.b16 %v416
  %v1099 = vunpack.c.l.b16 %v417
  %v1100 = vunpack.c.h.b16 %v417
  %v1101 = vunpack.c.l.b16 %v418
  %v1102 = vunpack.c.l.b16 %v419
  %v1103 = vunpack.c.h.b16 %v419
  %v1104 = vunpack.c.l.b16 %v420
  %v1105 = vunpack.c.h.b16 %v420
  %v1106 = vunpack.c.l.b16 %v421
  %v1107 = vunpack.c.l.b16 %v422
  %v1108 = vunpack.c.h.b16 %v422
  %v1109 = vunpack.c.l.b16 %v423
  %v1110 = vunpack.c.h.b16 %v423
  %v1111 = vunpack.c.l.b16 %v424
  %v1112 = vunpack.c.l.b16 %v425
  %v1113 = vunpack.c.h.b16 %v425
  %v1114 = vunpack.c.l.b16 %v426
  %v1115 = vunpack.c.h.b16 %v426
  %v1116 = vunpack.c.l.b16 %v427
  %v1117 = vunpack.c.l.b16 %v428
  %v1118 = vunpack.c.h.b16 %v428
  %v1119 = vunpack.c.l.b16 %v429
  %v1120 = vunpack.c.h.b16 %v429
  %v1121 = vunpack.c.l.b16 %v430
  %v1122 = vunpack.c.l.b16 %v431
  %v1123 = vunpack.c.h.b16 %v431
  %v1124 = vunpack.c.l.b16 %v432
  %v1125 = vunpack.c.h.b16 %v432
  %v1126 = vunpack.c.l.b16 %v433
  %v1127 = vunpack.c.l.b16 %v434
  %v1128 = vunpack.c.h.b16 %v434
  %v1129 = vunpack.c.l.b16 %v435
  %v1130 = vunpack.c.h.b16 %v435
  %v1131 = vunpack.c.l.b16 %v436
  %v1132 = vunpack.c.l.b16 %v437
  %v1133 = vunpack.c.h.b16 %v437
  %v1134 = vunpack.c.l.b16 %v438
  %v1135 = vunpack.c.h.b16 %v438
  %v1136 = vunpack.c.l.b16 %v439
  %v1137 = vunpack.c.l.b16 %v440
  %v1138 = vunpack.c.h.b16 %v440
  %v1139 = vunpack.c.l.b16 %v441
  %v1140 = vunpack.c.h.b16 %v441
  %v1141 = vunpack.c.l.b16 %v442
  %v1142 = vunpack.c.l.b16 %v443
  %v1143 = vunpack.c.h.b16 %v443
  %v1144 = vunpack.c.l.b16 %v444
  %v1145 = vunpack.c.h.b16 %v444
  %v1146 = vunpack.c.l.b16 %v445
  %v1147 = vunpack.c.l.b16 %v446
  %v1148 = vunpack.c.h.b16 %v446
  %v1149 = vunpack.c.l.b16 %v447
  %v1150 = vunpack.c.h.b16 %v447
  %v1151 = vunpack.c.l.b16 %v448
  %v1152 = vunpack.c.l.b16 %v449
  %v1153 = vunpack.c.h.b16 %v449
  %v1154 = vunpack.c.l.b16 %v450
  %v1155 = vunpack.c.h.b16 %v450
  %v1156 = vunpack.c.l.b16 %v451
  %v1157 = vunpack.c.l.b16 %v452
  %v1158 = vunpack.c.h.b16 %v452
  %v1159 = vunpack.c.l.b16 %v453
  %v1160 = vunpack.c.h.b16 %v453
  %v1161 = vunpack.c.l.b16 %v454
  %v1162 = vunpack.c.l.b16 %v455
  %v1163 = vunpack.c.h.b16 %v455
  %v1164 = vunpack.c.l.b16 %v456
  %v1165 = vunpack.c.h.b16 %v456
  %v1166 = vunpack.c.l.b16 %v457
  %v1167 = vunpack.c.l.b16 %v458
  %v1168 = vunpack.c.h.b16 %v458
  %v1169 = vunpack.c.l.b16 %v459
  %v1170 = vunpack.c.h.b16 %v459
  %v1171 = vunpack.c.l.b16 %v460
  %v1172 = vunpack.c.l.b16 %v461
  %v1173 = vunpack.c.h.b16 %v461
  %v1174 = vunpack.c.l.b16 %v462
  %v1175 = vunpack.c.h.b16 %v462
  %v1176 = vunpack.c.l.b16 %v463
  %v1177 = vunpack.c.l.b16 %v464
  %v1178 = vunpack.c.h.b16 %v464
  %v1179 = vunpack.c.l.b16 %v465
  %v1180 = vunpack.c.h.b16 %v465
  %v1181 = vunpack.c.l.b16 %v466
  %v1182 = vunpack.c.l.b16 %v467
  %v1183 = vunpack.c.h.b16 %v467
  %v1184 = vunpack.c.l.b16 %v468
  %v1185 = vunpack.c.h.b16 %v468
  %v1186 = vunpack.c.l.b16 %v469
  %v1187 = vunpack.c.l.b16 %v470
  %v1188 = vunpack.c.h.b16 %v470
  %v1189 = vunpack.c.l.b16 %v471
  %v1190 = vunpack.c.h.b16 %v471
  %v1191 = vunpack.c.l.b16 %v472
  %v1192 = vunpack.c.l.b16 %v473
  %v1193 = vunpack.c.h.b16 %v473
  %v1194 = vunpack.c.l.b16 %v474
  %v1195 = vunpack.c.h.b16 %v474
  %v1196 = vunpack.c.l.b16 %v475
  %v1197 = vunpack.c.l.b16 %v476
  %v1198 = vunpack.c.h.b16 %v476
  %v1199 = vunpack.c.l.b16 %v477
  %v1200 = vunpack.c.h.b16 %v477
  %v1201 = vunpack.c.l.b16 %v478
  %v1202 = vunpack.c.l.b16 %v479
  %v1203 = vunpack.c.h.b16 %v479
  %v1204 = vunpack.c.l.b16 %v480
  %v1205 = vunpack.c.h.b16 %v480
  %v1206 = vunpack.c.l.b16 %v481
  %v1207 = vunpack.c.l.b16 %v482
  %v1208 = vunpack.c.h.b16 %v482
  %v1209 = vunpack.c.l.b16 %v483
  %v1210 = vunpack.c.h.b16 %v483
  %v1211 = vunpack.c.l.b16 %v484
  %v1212 = vunpack.c.l.b16 %v485
  %v1213 = vunpack.c.h.b16 %v485
  %v1214 = vunpack.c.l.b16 %v486
  %v1215 = vunpack.c.h.b16 %v486
  %v1216 = vunpack.c.l.b16 %v487
  %v1217 = vunpack.c.l.b16 %v488
  %v1218 = vunpack.c.h.b16 %v488
  %v1219 = vunpack.c.l.b16 %v489
  %v1220 = vunpack.c.h.b16 %v489
  %v1221 = vunpack.c.l.b16 %v490
  %v1222 = vunpack.c.l.b16 %v491
  %v1223 = vunpack.c.h.b16 %v491
  %v1224 = vunpack.c.l.b16 %v492
  %v1225 = vunpack.c.h.b16 %v492
  %v1226 = vunpack.c.l.b16 %v493
  %v1227 = vunpack.c.l.b16 %v494
  %v1228 = vunpack.c.h.b16 %v494
  %v1229 = vunpack.c.l.b16 %v495
  %v1230 = vunpack.c.h.b16 %v495
  %v1231 = vunpack.c.l.b16 %v496
  %v1232 = vunpack.c.l.b16 %v497
  %v1233 = vunpack.c.h.b16 %v497
  %v1234 = vunpack.c.l.b16 %v498
  %v1235 = vunpack.c.h.b16 %v498
  %v1236 = vunpack.c.l.b16 %v499
  %v1237 = vunpack.c.l.b16 %v500
  %v1238 = vunpack.c.h.b16 %v500
  %v1239 = vunpack.c.l.b16 %v501
  %v1240 = vunpack.c.h.b16 %v501
  %v1241 = vunpack.c.l.b16 %v502
  %v1242 = vunpack.c.l.b16 %v503
  %v1243 = vunpack.c.h.b16 %v503
  %v1244 = vunpack.c.l.b16 %v504
  %v1245 = vunpack.c.h.b16 %v504
  %v1246 = vunpack.c.l.b16 %v505
  %v1247 = vunpack.c.l.b16 %v506
  %v1248 = vunpack.c.h.b16 %v506
  %v1249 = vunpack.c.l.b16 %v507
  %v1250 = vunpack.c.h.b16 %v507
  %v1251 = vunpack.c.l.b16 %v508
  %v1252 = vunpack.c.l.b16 %v509
  %v1253 = vunpack.c.h.b16 %v509
  %v1254 = vunpack.c.l.b16 %v510
  %v1255 = vunpack.c.h.b16 %v510
  %v1256 = vunpack.c.l.b16 %v511
  %v1257 = vunpack.c.l.b16 %v512
  %v1258 = vunpack.c.h.b16 %v512
  %v1259 = vunpack.c.l.b16 %v513
  %v1260 = vunpack.c.h.b16 %v513
  %v1261 = vunpack.c.l.b16 %v514
  %v1262 = vunpack.c.l.b16 %v515
  %v1263 = vunpack.c.h.b16 %v515
  %v1264 = vunpack.c.l.b16 %v516
  %v1265 = vunpack.c.h.b16 %v516
  %v1266 = vunpack.c.l.b16 %v517
  %v1267 = vunpack.c.l.b16 %v518
  %v1268 = vunpack.c.h.b16 %v518
  %v1269 = vunpack.c.l.b16 %v519
  %v1270 = vunpack.c.h.b16 %v519
  %v1271 = vunpack.c.l.b16 %v520
  %v1272 = vunpack.c.l.b16 %v521
  %v1273 = vunpack.c.h.b16 %v521
  %v1274 = vunpack.c.l.b16 %v522
  %v1275 = vunpack.c.h.b16 %v522
  %v1276 = vunpack.c.l.b16 %v523
  %v1277 = vunpack.c.l.b16 %v524
  %v1278 = vunpack.c.h.b16 %v524
  %v1279 = vunpack.c.l.b16 %v525
  %v1280 = vunpack.c.h.b16 %v525
  %v1281 = vunpack.c.l.b16 %v526
  %v1282 = vunpack.c.l.b16 %v527
  %v1283 = vunpack.c.h.b16 %v527
  %v1284 = vunpack.c.l.b16 %v528
  %v1285 = vunpack.c.h.b16 %v528
  %v1286 = vunpack.c.l.b16 %v529
  %v1287 = vunpack.c.l.b16 %v530
  %v1288 = vunpack.c.h.b16 %v530
  %v1289 = vunpack.c.l.b16 %v531
  %v1290 = vunpack.c.h.b16 %v531
  %v1291 = vunpack.c.l.b16 %v532
  %v1292 = vunpack.c.l.b16 %v533
  %v1293 = vunpack.c.h.b16 %v533
  %v1294 = vunpack.c.l.b16 %v534
  %v1295 = vunpack.c.h.b16 %v534
  %v1296 = vunpack.c.l.b16 %v535
  %v1297 = vunpack.c.l.b16 %v536
  %v1298 = vunpack.c.h.b16 %v536
  %v1299 = vunpack.c.l.b16 %v537
  %v1300 = vunpack.c.h.b16 %v537
  %v1301 = vunpack.c.l.b16 %v538
  %v1302 = vunpack.c.l.b16 %v539
  %v1303 = vunpack.c.h.b16 %v539
  %v1304 = vunpack.c.l.b16 %v540
  %v1305 = vunpack.c.h.b16 %v540
  %v1306 = vunpack.c.l.b16 %v541
  %v1307 = vunpack.c.l.b16 %v542
  %v1308 = vunpack.c.h.b16 %v542
  %v1309 = vunpack.c.l.b16 %v543
  %v1310 = vunpack.c.h.b16 %v543
  %v1311 = vunpack.c.l.b16 %v544
  %v1312 = vunpack.c.l.b16 %v545
  %v1313 = vunpack.c.h.b16 %v545
  %v1314 = vunpack.c.l.b16 %v546
  %v1315 = vunpack.c.h.b16 %v546
  %v1316 = vunpack.c.l.b16 %v547
  %v1317 = vunpack.c.l.b16 %v548
  %v1318 = vunpack.c.h.b16 %v548
  %v1319 = vunpack.c.l.b16 %v549
  %v1320 = vunpack.c.h.b16 %v549
  %v1321 = vunpack.c.l.b16 %v550
  %v1322 = vunpack.c.l.b16 %v551
  %v1323 = vunpack.c.h.b16 %v551
  %v1324 = vunpack.c.l.b16 %v552
  %v1325 = vunpack.c.h.b16 %v552
  %v1326 = vunpack.c.l.b16 %v553
  %v1327 = vunpack.c.l.b16 %v554
  %v1328 = vunpack.c.h.b16 %v554
  %v1329 = vunpack.c.l.b16 %v555
  %v1330 = vunpack.c.h.b16 %v555
  %v1331 = vunpack.c.l.b16 %v556
  %v1332 = vunpack.c.l.b16 %v557
  %v1333 = vunpack.c.h.b16 %v557
  %v1334 = vunpack.c.l.b16 %v558
  %v1335 = vunpack.c.h.b16 %v558
  %v1336 = vunpack.c.l.b16 %v559
  %v1337 = vunpack.c.l.b16 %v560
  %v1338 = vunpack.c.h.b16 %v560
  %v1339 = vunpack.c.l.b16 %v561
  %v1340 = vunpack.c.h.b16 %v561
  %v1341 = vunpack.c.l.b16 %v562
  %v1342 = vunpack.c.l.b16 %v563
  %v1343 = vunpack.c.h.b16 %v563
  %v1344 = vunpack.c.l.b16 %v564
  %v1345 = vunpack.c.h.b16 %v564
  %v1346 = vunpack.c.l.b16 %v565
  %v1347 = vunpack.c.l.b16 %v566
  %v1348 = vunpack.c.h.b16 %v566
  %v1349 = vunpack.c.l.b16 %v567
  %v1350 = vunpack.c.h.b16 %v567
  %v1351 = vunpack.c.l.b16 %v568
  %v1352 = vunpack.c.l.b16 %v569
  %v1353 = vunpack.c.h.b16 %v569
  %v1354 = vunpack.c.l.b16 %v570
  %v1355 = vunpack.c.h.b16 %v570
  %v1356 = vunpack.c.l.b16 %v571
  %v1357 = vunpack.c.l.b16 %v572
  %v1358 = vunpack.c.h.b16 %v572
  %v1359 = vunpack.c.l.b16 %v573
  %v1360 = vunpack.c.h.b16 %v573
  %v1361 = vunpack.c.l.b16 %v574
  %v1362 = vunpack.c.l.b16 %v575
  %v1363 = vunpack.c.h.b16 %v575
  %v1364 = vunpack.c.l.b16 %v576
  %v1365 = vunpack.c.h.b16 %v576
  %v1366 = vunpack.c.l.b16 %v577
  %v1367 = vunpack.c.l.b16 %v578
  %v1368 = vunpack.c.h.b16 %v578
  %v1369 = vunpack.c.l.b16 %v579
  %v1370 = vunpack.c.h.b16 %v579
  %v1371 = vunpack.c.l.b16 %v580
  %v1372 = vunpack.c.l.b16 %v581
  %v1373 = vunpack.c.h.b16 %v581
  %v1374 = vunpack.c.l.b16 %v582
  %v1375 = vunpack.c.h.b16 %v582
  %v1376 = vunpack.c.l.b16 %v583
  %v1377 = vunpack.c.l.b16 %v584
  %v1378 = vunpack.c.h.b16 %v584
  %v1379 = vunpack.c.l.b16 %v585
  %v1380 = vunpack.c.h.b16 %v585
  %v1381 = vunpack.c.l.b16 %v586
  %v1382 = vunpack.c.l.b16 %v587
  %v1383 = vunpack.c.h.b16 %v587
  %v1384 = vunpack.c.l.b16 %v588
  %v1385 = vunpack.c.h.b16 %v588
  %v1386 = vunpack.c.l.b16 %v589
  %v1387 = vunpack.c.l.b16 %v590
  %v1388 = vunpack.c.h.b16 %v590
  %v1389 = vunpack.c.l.b16 %v591
  %v1390 = vunpack.c.h.b16 %v591
  %v1391 = vunpack.c.l.b16 %v592
  %v1392 = vunpack.c.l.b16 %v593
  %v1393 = vunpack.c.h.b16 %v593
  %v1394 = vunpack.c.l.b16 %v594
  %v1395 = vunpack.c.h.b16 %v594
  %v1396 = vunpack.c.l.b16 %v595
  %v1397 = vunpack.c.l.b16 %v596
  %v1398 = vunpack.c.h.b16 %v596
  %v1399 = vunpack.c.l.b16 %v597
  %v1400 = vunpack.c.h.b16 %v597
  %v1401 = vunpack.c.l.b16 %v598
  %v1402 = vunpack.c.l.b16 %v599
  %v1403 = vunpack.c.h.b16 %v599
  %v1404 = vunpack.c.l.b16 %v600
  %v1405 = vunpack.c.h.b16 %v600
  %v1406 = vunpack.c.l.b16 %v601
  %v1407 = vunpack.c.l.b16 %v602
  %v1408 = vunpack.c.h.b16 %v602
  %v1409 = vunpack.c.l.b16 %v603
  %v1410 = vunpack.c.h.b16 %v603
  %v1411 = vunpack.c.l.b16 %v604
  %v1412 = vunpack.c.l.b16 %v605
  %v1413 = vunpack.c.h.b16 %v605
  %v1414 = vunpack.c.l.b16 %v606
  %v1415 = vunpack.c.h.b16 %v606
  %v1416 = vunpack.c.l.b16 %v607
  %v1417 = vunpack.c.l.b16 %v608
  %v1418 = vunpack.c.h.b16 %v608
  %v1419 = vunpack.c.l.b16 %v609
  %v1420 = vunpack.c.h.b16 %v609
  %v1421 = vunpack.c.l.b16 %v610
  %v1422 = vunpack.c.l.b16 %v611
  %v1423 = vunpack.c.h.b16 %v611
  %v1424 = vunpack.c.l.b16 %v612
  %v1425 = vunpack.c.h.b16 %v612
  %v1426 = vunpack.c.l.b16 %v613
  %v1427 = vunpack.c.l.b16 %v614
  %v1428 = vunpack.c.h.b16 %v614
  %v1429 = vunpack.c.l.b16 %v615
  %v1430 = vunpack.c.h.b16 %v615
  %v1431 = vunpack.c.l.b16 %v616
  %v1432 = vunpack.c.l.b16 %v617
  %v1433 = vunpack.c.h.b16 %v617
  %v1434 = vunpack.c.l.b16 %v618
  %v1435 = vunpack.c.h.b16 %v618
  %v1436 = vunpack.c.l.b16 %v619
  %v1437 = vunpack.c.l.b16 %v620
  %v1438 = vunpack.c.h.b16 %v620
  %v1439 = vunpack.c.l.b16 %v621
  %v1440 = vunpack.c.h.b16 %v621
  %v1441 = vunpack.c.l.b16 %v622
  %v1442 = vunpack.c.l.b16 %v623
  %v1443 = vunpack.c.h.b16 %v623
  %v1444 = vunpack.c.l.b16 %v624
  %v1445 = vunpack.c.h.b16 %v624
  %v1446 = vunpack.c.l.b16 %v625
  %v1447 = vunpack.c.l.b16 %v626
  %v1448 = vunpack.c.h.b16 %v626
  %v1449 = vunpack.c.l.b16 %v627
  %v1450 = vunpack.c.h.b16 %v627
  %v1451 = vunpack.c.l.b16 %v628
  %v1452 = vunpack.c.l.b16 %v629
  %v1453 = vunpack.c.h.b16 %v629
  %v1454 = vunpack.c.l.b16 %v630
  %v1455 = vunpack.c.h.b16 %v630
  %v1456 = vunpack.c.l.b16 %v631
  %v1457 = vunpack.c.l.b16 %v632
  %v1458 = vunpack.c.h.b16 %v632
  %v1459 = vunpack.c.l.b16 %v633
  %v1460 = vunpack.c.h.b16 %v633
  %v1461 = vunpack.c.l.b16 %v634
  %v1462 = vpack.c.b16 %v967, %v962
  %v1463 = vpack.c.b16 %v968, %v963
  %v1464 = vpack.c.b16 %v969, %v964
  %v1465 = vpack.c.b16 %v970, %v965
  %v1466 = vpack.c.b16 %v971, %v966
  %v1467 = vpack.c.b16 %v977, %v972
  %v1468 = vpack.c.b16 %v978, %v973
  %v1469 = vpack.c.b16 %v979, %v974
  %v1470 = vpack.c.b16 %v980, %v975
  %v1471 = vpack.c.b16 %v981, %v976
  %v1472 = vpack.c.b16 %v987, %v982
  %v1473 = vpack.c.b16 %v988, %v983
  %v1474 = vpack.c.b16 %v989, %v984
  %v1475 = vpack.c.b16 %v990, %v985
  %v1476 = vpack.c.b16 %v991, %v986
  %v1477 = vpack.c.b16 %v997, %v992
  %v1478 = vpack.c.b16 %v998, %v993
  %v1479 = vpack.c.b16 %v999, %v994
  %v1480 = vpack.c.b16 %v1000, %v995
  %v1481 = vpack.c.b16 %v1001, %v996
  %v1482 = vpack.c.b16 %v1007, %v1002
  %v1483 = vpack.c.b16 %v1008, %v1003
  %v1484 = vpack.c.b16 %v1009, %v1004
  %v1485 = vpack.c.b16 %v1010, %v1005
  %v1486 = vpack.c.b16 %v1011, %v1006
  %v1487 = vpack.c.b16 %v1017, %v1012
  %v1488 = vpack.c.b16 %v1018, %v1013
  %v1489 = vpack.c.b16 %v1019, %v1014
  %v1490 = vpack.c.b16 %v1020, %v1015
  %v1491 = vpack.c.b16 %v1021, %v1016
  %v1492 = vpack.c.b16 %v1027, %v1022
  %v1493 = vpack.c.b16 %v1028, %v1023
  %v1494 = vpack.c.b16 %v1029, %v1024
  %v1495 = vpack.c.b16 %v1030, %v1025
  %v1496 = vpack.c.b16 %v1031, %v1026
  %v1497 = vpack.c.b16 %v1037, %v1032
  %v1498 = vpack.c.b16 %v1038, %v1033
  %v1499 = vpack.c.b16 %v1039, %v1034
  %v1500 = vpack.c.b16 %v1040, %v1035
  %v1501 = vpack.c.b16 %v1041, %v1036
  %v1502 = vpack.c.b16 %v1047, %v1042
  %v1503 = vpack.c.b16 %v1048, %v1043
  %v1504 = vpack.c.b16 %v1049, %v1044
  %v1505 = vpack.c.b16 %v1050, %v1045
  %v1506 = vpack.c.b16 %v1051, %v1046
  %v1507 = vpack.c.b16 %v1057, %v1052
  %v1508 = vpack.c.b16 %v1058, %v1053
  %v1509 = vpack.c.b16 %v1059, %v1054
  %v1510 = vpack.c.b16 %v1060, %v1055
  %v1511 = vpack.c.b16 %v1061, %v1056
  %v1512 = vpack.c.b16 %v1067, %v1062
  %v1513 = vpack.c.b16 %v1068, %v1063
  %v1514 = vpack.c.b16 %v1069, %v1064
  %v1515 = vpack.c.b16 %v1070, %v1065
  %v1516 = vpack.c.b16 %v1071, %v1066
  %v1517 = vpack.c.b16 %v1077, %v1072
  %v1518 = vpack.c.b16 %v1078, %v1073
  %v1519 = vpack.c.b16 %v1079, %v1074
  %v1520 = vpack.c.b16 %v1080, %v1075
  %v1521 = vpack.c.b16 %v1081, %v1076
  %v1522 = vpack.c.b16 %v1087, %v1082
  %v1523 = vpack.c.b16 %v1088, %v1083
  %v1524 = vpack.c.b16 %v1089, %v1084
  %v1525 = vpack.c.b16 %v1090, %v1085
  %v1526 = vpack.c.b16 %v1091, %v1086
  %v1527 = vpack.c.b16 %v1097, %v1092
  %v1528 = vpack.c.b16 %v1098, %v1093
  %v1529 = vpack.c.b16 %v1099, %v1094
  %v1530 = vpack.c.b16 %v1100, %v1095
  %v1531 = vpack.c.b16 %v1101, %v1096
  %v1532 = vpack.c.b16 %v1107, %v1102
  %v1533 = vpack.c.b16 %v1108, %v1103
  %v1534 = vpack.c.b16 %v1109, %v1104
  %v1535 = vpack.c.b16 %v1110, %v1105
  %v1536 = vpack.c.b16 %v1111, %v1106
  %v1537 = vpack.c.b16 %v1117, %v1112
  %v1538 = vpack.c.b16 %v1118, %v1113
  %v1539 = vpack.c.b16 %v1119, %v1114
  %v1540 = vpack.c.b16 %v1120, %v1115
  %v1541 = vpack.c.b16 %v1121, %v1116
  %v1542 = vpack.c.b16 %v1127, %v1122
  %v1543 = vpack.c.b16 %v1128, %v1123
  %v1544 = vpack.c.b16 %v1129, %v1124
  %v1545 = vpack.c.b16 %v1130, %v1125
  %v1546 = vpack.c.b16 %v1131, %v1126
  %v1547 = vpack.c.b16 %v1137, %v1132
  %v1548 = vpack.c.b16 %v1138, %v1133
  %v1549 = vpack.c.b16 %v1139, %v1134
  %v1550 = vpack.c.b16 %v1140, %v1135
  %v1551 = vpack.c.b16 %v1141, %v1136
  %v1552 = vpack.c.b16 %v1147, %v1142
  %v1553 = vpack.c.b16 %v1148, %v1143
  %v1554 = vpack.c.b16 %v1149, %v1144
  %v1555 = vpack.c.b16 %v1150, %v1145
  %v1556 = vpack.c.b16 %v1151, %v1146
  %v1557 = vpack.c.b16 %v1157, %v1152
  %v1558 = vpack.c.b16 %v1158, %v1153
  %v1559 = vpack.c.b16 %v1159, %v1154
  %v1560 = vpack.c.b16 %v1160, %v1155
  %v1561 = vpack.c.b16 %v1161, %v1156
  %v1562 = vpack.c.b16 %v1167, %v1162
  %v1563 = vpack.c.b16 %v1168, %v1163
  %v1564 = vpack.c.b16 %v1169, %v1164
  %v1565 = vpack.c.b16 %v1170, %v1165
  %v1566 = vpack.c.b16 %v1171, %v1166
  %v1567 = vpack.c.b16 %v1177, %v1172
  %v1568 = vpack.c.b16 %v1178, %v1173
  %v1569 = vpack.c.b16 %v1179, %v1174
  %v1570 = vpack.c.b16 %v1180, %v1175
  %v1571 = vpack.c.b16 %v1181, %v1176
  %v1572 = vpack.c.b16 %v1187, %v1182
  %v1573 = vpack.c.b16 %v1188, %v1183
  %v1574 = vpack.c.b16 %v1189, %v1184
  %v1575 = vpack.c.b16 %v1190, %v1185
  %v1576 = vpack.c.b16 %v1191, %v1186
  %v1577 = vpack.c.b16 %v1197, %v1192
  %v1578 = vpack.c.b16 %v1198, %v1193
  %v1579 = vpack.c.b16 %v1199, %v1194
  %v1580 = vpack.c.b16 %v1200, %v1195
  %v1581 = vpack.c.b16 %v1201, %v1196
  %v1582 = vpack.c.b16 %v1207, %v1202
  %v1583 = vpack.c.b16 %v1208, %v1203
  %v1584 = vpack.c.b16 %v1209, %v1204
  %v1585 = vpack.c.b16 %v1210, %v1205
  %v1586 = vpack.c.b16 %v1211, %v1206
  %v1587 = vpack.c.b16 %v1217, %v1212
  %v1588 = vpack.c.b16 %v1218, %v1213
  %v1589 = vpack.c.b16 %v1219, %v1214
  %v1590 = vpack.c.b16 %v1220, %v1215
  %v1591 = vpack.c.b16 %v1221, %v1216
  %v1592 = vpack.c.b16 %v1227, %v1222
  %v1593 = vpack.c.b16 %v1228, %v1223
  %v1594 = vpack.c.b16 %v1229, %v1224
  %v1595 = vpack.c.b16 %v1230, %v1225
  %v1596 = vpack.c.b16 %v1231, %v1226
  %v1597 = vpack.c.b16 %v1237, %v1232
  %v1598 = vpack.c.b16 %v1238, %v1233
  %v1599 = vpack.c.b16 %v1239, %v1234
  %v1600 = vpack.c.b16 %v1240, %v1235
  %v1601 = vpack.c.b16 %v1241, %v1236
  %v1602 = vpack.c.b16 %v1247, %v1242
  %v1603 = vpack.c.b16 %v1248, %v1243
  %v1604 = vpack.c.b16 %v1249, %v1244
  %v1605 = vpack.c.b16 %v1250, %v1245
  %v1606 = vpack.c.b16 %v1251, %v1246
  %v1607 = vpack.c.b16 %v1257, %v1252
  %v1608 = vpack.c.b16 %v1258, %v1253
  %v1609 = vpack.c.b16 %v1259, %v1254
  %v1610 = vpack.c.b16 %v1260, %v1255
  %v1611 = vpack.c.b16 %v1261, %v1256
  %v1612 = vpack.c.b16 %v1267, %v1262
  %v1613 = vpack.c.b16 %v1268, %v1263
  %v1614 = vpack.c.b16 %v1269, %v1264
  %v1615 = vpack.c.b16 %v1270, %v1265
  %v1616 = vpack.c.b16 %v1271, %v1266
  %v1617 = vpack.c.b16 %v1277, %v1272
  %v1618 = vpack.c.b16 %v1278, %v1273
  %v1619 = vpack.c.b16 %v1279, %v1274
  %v1620 = vpack.c.b16 %v1280, %v1275
  %v1621 = vpack.c.b16 %v1281, %v1276
  %v1622 = vpack.c.b16 %v1287, %v1282
  %v1623 = vpack.c.b16 %v1288, %v1283
  %v1624 = vpack.c.b16 %v1289, %v1284
  %v1625 = vpack.c.b16 %v1290, %v1285
  %v1626 = vpack.c.b16 %v1291, %v1286
  %v1627 = vpack.c.b16 %v1297, %v1292
  %v1628 = vpack.c.b16 %v1298, %v1293
  %v1629 = vpack.c.b16 %v1299, %v1294
  %v1630 = vpack.c.b16 %v1300, %v1295
  %v1631 = vpack.c.b16 %v1301, %v1296
  %v1632 = vpack.c.b16 %v1307, %v1302
  %v1633 = vpack.c.b16 %v1308, %v1303
  %v1634 = vpack.c.b16 %v1309, %v1304
  %v1635 = vpack.c.b16 %v1310, %v1305
  %v1636 = vpack.c.b16 %v1311, %v1306
  %v1637 = vpack.c.b16 %v1317, %v1312
  %v1638 = vpack.c.b16 %v1318, %v1313
  %v1639 = vpack.c.b16 %v1319, %v1314
  %v1640 = vpack.c.b16 %v1320, %v1315
  %v1641 = vpack.c.b16 %v1321, %v1316
  %v1642 = vpack.c.b16 %v1327, %v1322
  %v1643 = vpack.c.b16 %v1328, %v1323
  %v1644 = vpack.c.b16 %v1329, %v1324
  %v1645 = vpack.c.b16 %v1330, %v1325
  %v1646 = vpack.c.b16 %v1331, %v1326
  %v1647 = vpack.c.b16 %v1337, %v1332
  %v1648 = vpack.c.b16 %v1338, %v1333
  %v1649 = vpack.c.b16 %v1339, %v1334
  %v1650 = vpack.c.b16 %v1340, %v1335
  %v1651 = vpack.c.b16 %v1341, %v1336
  %v1652 = vpack.c.b16 %v1347, %v1342
  %v1653 = vpack.c.b16 %v1348, %v1343
  %v1654 = vpack.c.b16 %v1349, %v1344
  %v1655 = vpack.c.b16 %v1350, %v1345
  %v1656 = vpack.c.b16 %v1351, %v1346
  %v1657 = vpack.c.b16 %v1357, %v1352
  %v1658 = vpack.c.b16 %v1358, %v1353
  %v1659 = vpack.c.b16 %v1359, %v1354
  %v1660 = vpack.c.b16 %v1360, %v1355
  %v1661 = vpack.c.b16 %v1361, %v1356
  %v1662 = vpack.c.b16 %v1367, %v1362
  %v1663 = vpack.c.b16 %v1368, %v1363
  %v1664 = vpack.c.b16 %v1369, %v1364
  %v1665 = vpack.c.b16 %v1370, %v1365
  %v1666 = vpack.c.b16 %v1371, %v1366
  %v1667 = vpack.c.b16 %v1377, %v1372
  %v1668 = vpack.c.b16 %v1378, %v1373
  %v1669 = vpack.c.b16 %v1379, %v1374
  %v1670 = vpack.c.b16 %v1380, %v1375
  %v1671 = vpack.c.b16 %v1381, %v1376
  %v1672 = vpack.c.b16 %v1387, %v1382
  %v1673 = vpack.c.b16 %v1388, %v1383
  %v1674 = vpack.c.b16 %v1389, %v1384
  %v1675 = vpack.c.b16 %v1390, %v1385
  %v1676 = vpack.c.b16 %v1391, %v1386
  %v1677 = vpack.c.b16 %v1397, %v1392
  %v1678 = vpack.c.b16 %v1398, %v1393
  %v1679 = vpack.c.b16 %v1399, %v1394
  %v1680 = vpack.c.b16 %v1400, %v1395
  %v1681 = vpack.c.b16 %v1401, %v1396
  %v1682 = vpack.c.b16 %v1407, %v1402
  %v1683 = vpack.c.b16 %v1408, %v1403
  %v1684 = vpack.c.b16 %v1409, %v1404
  %v1685 = vpack.c.b16 %v1410, %v1405
  %v1686 = vpack.c.b16 %v1411, %v1406
  %v1687 = vpack.c.b16 %v1417, %v1412
  %v1688 = vpack.c.b16 %v1418, %v1413
  %v1689 = vpack.c.b16 %v1419, %v1414
  %v1690 = vpack.c.b16 %v1420, %v1415
  %v1691 = vpack.c.b16 %v1421, %v1416
  %v1692 = vpack.c.b16 %v1427, %v1422
  %v1693 = vpack.c.b16 %v1428, %v1423
  %v1694 = vpack.c.b16 %v1429, %v1424
  %v1695 = vpack.c.b16 %v1430, %v1425
  %v1696 = vpack.c.b16 %v1431, %v1426
  %v1697 = vpack.c.b16 %v1437, %v1432
  %v1698 = vpack.c.b16 %v1438, %v1433
  %v1699 = vpack.c.b16 %v1439, %v1434
  %v1700 = vpack.c.b16 %v1440, %v1435
  %v1701 = vpack.c.b16 %v1441, %v1436
  %v1702 = vpack.c.b16 %v1447, %v1442
  %v1703 = vpack.c.b16 %v1448, %v1443
  %v1704 = vpack.c.b16 %v1449, %v1444
  %v1705 = vpack.c.b16 %v1450, %v1445
  %v1706 = vpack.c.b16 %v1451, %v1446
  %v1707 = vpack.c.b16 %v1457, %v1452
  %v1708 = vpack.c.b16 %v1458, %v1453
  %v1709 = vpack.c.b16 %v1459, %v1454
  %v1710 = vpack.c.b16 %v1460, %v1455
  %v1711 = vpack.c.b16 %v1461, %v1456
  %vm1962 = vcmask 261120
  %v1964 = vsel %vm1962, %v334, 0
  %1966 = vmatprep.subr.bf16.mxu0 %v1463
  %1967 = vmatpush1.bf16.msra.mxu0 %v1462
  %1968 = vmatprep.subr.bf16.mxu0 %v1468
  %1969 = vmatpush1.bf16.msra.mxu0 %v1467
  %1970 = vmatprep.subr.bf16.mxu0 %v1473
  %1971 = vmatpush1.bf16.msra.mxu0 %v1472
  %1972 = vmatprep.subr.bf16.mxu0 %v1478
  %1973 = vmatpush1.bf16.msra.mxu0 %v1477
  %1974 = vmatprep.subr.bf16.mxu0 %v1483
  %1975 = vmatpush1.bf16.msra.mxu0 %v1482
  %1976 = vmatprep.subr.bf16.mxu0 %v1488
  %1977 = vmatpush1.bf16.msra.mxu0 %v1487
  %1978 = vmatprep.subr.bf16.mxu0 %v1493
  %1979 = vmatpush1.bf16.msra.mxu0 %v1492
  %1980 = vmatprep.subr.bf16.mxu0 %v1498
  %1981 = vmatpush1.bf16.msra.mxu0 %v1497
  %1982 = vmatprep.subr.bf16.mxu0 %v1503
  %1983 = vmatpush1.bf16.msra.mxu0 %v1502
  %1984 = vmatprep.subr.bf16.mxu0 %v1508
  %1985 = vmatpush1.bf16.msra.mxu0 %v1507
  %1986 = vmatprep.subr.bf16.mxu0 %v1513
  %1987 = vmatpush1.bf16.msra.mxu0 %v1512
  %1988 = vmatprep.subr.bf16.mxu0 %v1518
  %1989 = vmatpush1.bf16.msra.mxu0 %v1517
  %1990 = vmatprep.subr.bf16.mxu0 %v1523
  %1991 = vmatpush1.bf16.msra.mxu0 %v1522
  %1992 = vmatprep.subr.bf16.mxu0 %v1528
  %1993 = vmatpush1.bf16.msra.mxu0 %v1527
  %1994 = vmatprep.subr.bf16.mxu0 %v1533
  %1995 = vmatpush1.bf16.msra.mxu0 %v1532
  %1996 = vmatprep.subr.bf16.mxu0 %v1538
  %1997 = vmatpush1.bf16.msra.mxu0 %v1537
  %1998 = vmatprep.mubr.bf16.mxu0 %v329
  %1999 = vmatmul.mubr.bf16.gmra.mrb[0].mxu0 %v328
  %v2000 = vpop.f32.mrb[0].mxu0
  %v2001 = vadd.f32 %v640, %v2000
  %v2002 = vpop.f32.mrb[0].mxu0
  %v2003 = vadd.f32 %v644, %v2002
  %v2004 = vpop.f32.mrb[0].mxu0
  %v2005 = vpop.f32.mrb[0].mxu0
  %2006 = vdwg.mxu0
  %2007 = vmatprep.subr.bf16.mxu0 %v1543
  %2008 = vmatpush1.bf16.msra.mxu0 %v1542
  %2009 = vmatprep.subr.bf16.mxu0 %v1548
  %2010 = vmatpush1.bf16.msra.mxu0 %v1547
  %2011 = vmatprep.subr.bf16.mxu0 %v1553
  %2012 = vmatpush1.bf16.msra.mxu0 %v1552
  %2013 = vmatprep.subr.bf16.mxu0 %v1558
  %2014 = vmatpush1.bf16.msra.mxu0 %v1557
  %2015 = vmatprep.subr.bf16.mxu0 %v1563
  %2016 = vmatpush1.bf16.msra.mxu0 %v1562
  %2017 = vmatprep.subr.bf16.mxu0 %v1568
  %2018 = vmatpush1.bf16.msra.mxu0 %v1567
  %2019 = vmatprep.subr.bf16.mxu0 %v1573
  %2020 = vmatpush1.bf16.msra.mxu0 %v1572
  %2021 = vmatprep.subr.bf16.mxu0 %v1578
  %2022 = vmatpush1.bf16.msra.mxu0 %v1577
  %2023 = vmatprep.subr.bf16.mxu0 %v1583
  %2024 = vmatpush1.bf16.msra.mxu0 %v1582
  %2025 = vmatprep.subr.bf16.mxu0 %v1588
  %2026 = vmatpush1.bf16.msra.mxu0 %v1587
  %2027 = vmatprep.subr.bf16.mxu0 %v1593
  %2028 = vmatpush1.bf16.msra.mxu0 %v1592
  %2029 = vmatprep.subr.bf16.mxu0 %v1598
  %2030 = vmatpush1.bf16.msra.mxu0 %v1597
  %2031 = vmatprep.subr.bf16.mxu0 %v1603
  %2032 = vmatpush1.bf16.msra.mxu0 %v1602
  %2033 = vmatprep.subr.bf16.mxu0 %v1608
  %2034 = vmatpush1.bf16.msra.mxu0 %v1607
  %2035 = vmatprep.subr.bf16.mxu0 %v1613
  %2036 = vmatpush1.bf16.msra.mxu0 %v1612
  %2037 = vmatprep.subr.bf16.mxu0 %v1618
  %2038 = vmatpush1.bf16.msra.mxu0 %v1617
  %2039 = vmatprep.mubr.bf16.mxu0 %v331
  %2040 = vmatmul.mubr.bf16.gmra.mrb[0].mxu0 %v330
  %v2041 = vpop.f32.mrb[0].mxu0
  %v2042 = vadd.f32 %v2001, %v2041
  %v2043 = vpop.f32.mrb[0].mxu0
  %v2044 = vadd.f32 %v2003, %v2043
  %v2045 = vpop.f32.mrb[0].mxu0
  %v2046 = vpop.f32.mrb[0].mxu0
  %2047 = vdwg.mxu0
  %2048 = vmatprep.subr.bf16.mxu0 %v1623
  %2049 = vmatpush1.bf16.msra.mxu0 %v1622
  %2050 = vmatprep.subr.bf16.mxu0 %v1628
  %2051 = vmatpush1.bf16.msra.mxu0 %v1627
  %2052 = vmatprep.subr.bf16.mxu0 %v1633
  %2053 = vmatpush1.bf16.msra.mxu0 %v1632
  %2054 = vmatprep.subr.bf16.mxu0 %v1638
  %2055 = vmatpush1.bf16.msra.mxu0 %v1637
  %2056 = vmatprep.subr.bf16.mxu0 %v1643
  %2057 = vmatpush1.bf16.msra.mxu0 %v1642
  %2058 = vmatprep.subr.bf16.mxu0 %v1648
  %2059 = vmatpush1.bf16.msra.mxu0 %v1647
  %2060 = vmatprep.subr.bf16.mxu0 %v1653
  %2061 = vmatpush1.bf16.msra.mxu0 %v1652
  %2062 = vmatprep.subr.bf16.mxu0 %v1658
  %2063 = vmatpush1.bf16.msra.mxu0 %v1657
  %2064 = vmatprep.subr.bf16.mxu0 %v1663
  %2065 = vmatpush1.bf16.msra.mxu0 %v1662
  %2066 = vmatprep.subr.bf16.mxu0 %v1668
  %2067 = vmatpush1.bf16.msra.mxu0 %v1667
  %2068 = vmatprep.subr.bf16.mxu0 %v1673
  %2069 = vmatpush1.bf16.msra.mxu0 %v1672
  %2070 = vmatprep.subr.bf16.mxu0 %v1678
  %2071 = vmatpush1.bf16.msra.mxu0 %v1677
  %2072 = vmatprep.subr.bf16.mxu0 %v1683
  %2073 = vmatpush1.bf16.msra.mxu0 %v1682
  %2074 = vmatprep.subr.bf16.mxu0 %v1688
  %2075 = vmatpush1.bf16.msra.mxu0 %v1687
  %2076 = vmatprep.subr.bf16.mxu0 %v1693
  %2077 = vmatpush1.bf16.msra.mxu0 %v1692
  %2078 = vmatprep.subr.bf16.mxu0 %v1698
  %2079 = vmatpush1.bf16.msra.mxu0 %v1697
  %2080 = vmatprep.mubr.bf16.mxu0 %v333
  %2081 = vmatmul.mubr.bf16.gmra.mrb[0].mxu0 %v332
  %v2082 = vpop.f32.mrb[0].mxu0
  %v2083 = vadd.f32 %v2042, %v2082
  %v2084 = vpop.f32.mrb[0].mxu0
  %v2085 = vadd.f32 %v2044, %v2084
  %v2086 = vpop.f32.mrb[0].mxu0
  %v2087 = vpop.f32.mrb[0].mxu0
  %2088 = vdwg.mxu0
  %2089 = vmatprep.subr.bf16.mxu0 %v1703
  %2090 = vmatpush1.bf16.msra.mxu0 %v1702
  %2091 = vmatprep.subr.bf16.mxu0 %v1708
  %2092 = vmatpush1.bf16.msra.mxu0 %v1707
  %2093 = vmatprep.subr.bf16.mxu0 0
  %2094 = vmatpush1.bf16.msra.mxu0 0
  %2095 = vmatprep.subr.bf16.mxu0 0
  %2096 = vmatpush1.bf16.msra.mxu0 0
  %2097 = vmatprep.subr.bf16.mxu0 0
  %2098 = vmatpush1.bf16.msra.mxu0 0
  %2099 = vmatprep.subr.bf16.mxu0 0
  %2100 = vmatpush1.bf16.msra.mxu0 0
  %2101 = vmatprep.subr.bf16.mxu0 0
  %2102 = vmatpush1.bf16.msra.mxu0 0
  %2103 = vmatprep.subr.bf16.mxu0 0
  %2104 = vmatpush1.bf16.msra.mxu0 0
  %2105 = vmatprep.subr.bf16.mxu0 0
  %2106 = vmatpush1.bf16.msra.mxu0 0
  %2107 = vmatprep.subr.bf16.mxu0 0
  %2108 = vmatpush1.bf16.msra.mxu0 0
  %2109 = vmatprep.subr.bf16.mxu0 0
  %2110 = vmatpush1.bf16.msra.mxu0 0
  %2111 = vmatprep.subr.bf16.mxu0 0
  %2112 = vmatpush1.bf16.msra.mxu0 0
  %2113 = vmatprep.subr.bf16.mxu0 0
  %2114 = vmatpush1.bf16.msra.mxu0 0
  %2115 = vmatprep.subr.bf16.mxu0 0
  %2116 = vmatpush1.bf16.msra.mxu0 0
  %2117 = vmatprep.subr.bf16.mxu0 0
  %2118 = vmatpush1.bf16.msra.mxu0 0
  %2119 = vmatprep.subr.bf16.mxu0 0
  %2120 = vmatpush1.bf16.msra.mxu0 0
  %2121 = vmatprep.mubr.bf16.mxu0 0
  %2122 = vmatmul.mubr.bf16.gmra.mrb[0].mxu0 %v1964
  %v2123 = vpop.f32.mrb[0].mxu0
  %v2124 = vadd.f32 %v2083, %v2123
  %v2125 = vpop.f32.mrb[0].mxu0
  %v2126 = vadd.f32 %v2085, %v2125
  %v2127 = vpop.f32.mrb[0].mxu0
  %v2128 = vpop.f32.mrb[0].mxu0
  %2129 = vdwg.mxu0
  %2130 = vmatprep.subr.bf16.mxu0 %v1465
  %2131 = vmatpush1.bf16.msra.mxu0 %v1464
  %2132 = vmatprep.subr.bf16.mxu0 %v1470
  %2133 = vmatpush1.bf16.msra.mxu0 %v1469
  %2134 = vmatprep.subr.bf16.mxu0 %v1475
  %2135 = vmatpush1.bf16.msra.mxu0 %v1474
  %2136 = vmatprep.subr.bf16.mxu0 %v1480
  %2137 = vmatpush1.bf16.msra.mxu0 %v1479
  %2138 = vmatprep.subr.bf16.mxu0 %v1485
  %2139 = vmatpush1.bf16.msra.mxu0 %v1484
  %2140 = vmatprep.subr.bf16.mxu0 %v1490
  %2141 = vmatpush1.bf16.msra.mxu0 %v1489
  %2142 = vmatprep.subr.bf16.mxu0 %v1495
  %2143 = vmatpush1.bf16.msra.mxu0 %v1494
  %2144 = vmatprep.subr.bf16.mxu0 %v1500
  %2145 = vmatpush1.bf16.msra.mxu0 %v1499
  %2146 = vmatprep.subr.bf16.mxu0 %v1505
  %2147 = vmatpush1.bf16.msra.mxu0 %v1504
  %2148 = vmatprep.subr.bf16.mxu0 %v1510
  %2149 = vmatpush1.bf16.msra.mxu0 %v1509
  %2150 = vmatprep.subr.bf16.mxu0 %v1515
  %2151 = vmatpush1.bf16.msra.mxu0 %v1514
  %2152 = vmatprep.subr.bf16.mxu0 %v1520
  %2153 = vmatpush1.bf16.msra.mxu0 %v1519
  %2154 = vmatprep.subr.bf16.mxu0 %v1525
  %2155 = vmatpush1.bf16.msra.mxu0 %v1524
  %2156 = vmatprep.subr.bf16.mxu0 %v1530
  %2157 = vmatpush1.bf16.msra.mxu0 %v1529
  %2158 = vmatprep.subr.bf16.mxu0 %v1535
  %2159 = vmatpush1.bf16.msra.mxu0 %v1534
  %2160 = vmatprep.subr.bf16.mxu0 %v1540
  %2161 = vmatpush1.bf16.msra.mxu0 %v1539
  %2162 = vmatprep.mubr.bf16.mxu0 %v329
  %2163 = vmatmul.mubr.bf16.gmra.mrb[0].mxu0 %v328
  %v2164 = vpop.f32.mrb[0].mxu0
  %v2165 = vadd.f32 %v648, %v2164
  %v2166 = vpop.f32.mrb[0].mxu0
  %v2167 = vadd.f32 %v652, %v2166
  %v2168 = vpop.f32.mrb[0].mxu0
  %v2169 = vpop.f32.mrb[0].mxu0
  %2170 = vdwg.mxu0
  %2171 = vmatprep.subr.bf16.mxu0 %v1545
  %2172 = vmatpush1.bf16.msra.mxu0 %v1544
  %2173 = vmatprep.subr.bf16.mxu0 %v1550
  %2174 = vmatpush1.bf16.msra.mxu0 %v1549
  %2175 = vmatprep.subr.bf16.mxu0 %v1555
  %2176 = vmatpush1.bf16.msra.mxu0 %v1554
  %2177 = vmatprep.subr.bf16.mxu0 %v1560
  %2178 = vmatpush1.bf16.msra.mxu0 %v1559
  %2179 = vmatprep.subr.bf16.mxu0 %v1565
  %2180 = vmatpush1.bf16.msra.mxu0 %v1564
  %2181 = vmatprep.subr.bf16.mxu0 %v1570
  %2182 = vmatpush1.bf16.msra.mxu0 %v1569
  %2183 = vmatprep.subr.bf16.mxu0 %v1575
  %2184 = vmatpush1.bf16.msra.mxu0 %v1574
  %2185 = vmatprep.subr.bf16.mxu0 %v1580
  %2186 = vmatpush1.bf16.msra.mxu0 %v1579
  %2187 = vmatprep.subr.bf16.mxu0 %v1585
  %2188 = vmatpush1.bf16.msra.mxu0 %v1584
  %2189 = vmatprep.subr.bf16.mxu0 %v1590
  %2190 = vmatpush1.bf16.msra.mxu0 %v1589
  %2191 = vmatprep.subr.bf16.mxu0 %v1595
  %2192 = vmatpush1.bf16.msra.mxu0 %v1594
  %2193 = vmatprep.subr.bf16.mxu0 %v1600
  %2194 = vmatpush1.bf16.msra.mxu0 %v1599
  %2195 = vmatprep.subr.bf16.mxu0 %v1605
  %2196 = vmatpush1.bf16.msra.mxu0 %v1604
  %2197 = vmatprep.subr.bf16.mxu0 %v1610
  %2198 = vmatpush1.bf16.msra.mxu0 %v1609
  %2199 = vmatprep.subr.bf16.mxu0 %v1615
  %2200 = vmatpush1.bf16.msra.mxu0 %v1614
  %2201 = vmatprep.subr.bf16.mxu0 %v1620
  %2202 = vmatpush1.bf16.msra.mxu0 %v1619
  %2203 = vmatprep.mubr.bf16.mxu0 %v331
  %2204 = vmatmul.mubr.bf16.gmra.mrb[0].mxu0 %v330
  %v2205 = vpop.f32.mrb[0].mxu0
  %v2206 = vadd.f32 %v2165, %v2205
  %v2207 = vpop.f32.mrb[0].mxu0
  %v2208 = vadd.f32 %v2167, %v2207
  %v2209 = vpop.f32.mrb[0].mxu0
  %v2210 = vpop.f32.mrb[0].mxu0
  %2211 = vdwg.mxu0
  %2212 = vmatprep.subr.bf16.mxu0 %v1625
  %2213 = vmatpush1.bf16.msra.mxu0 %v1624
  %2214 = vmatprep.subr.bf16.mxu0 %v1630
  %2215 = vmatpush1.bf16.msra.mxu0 %v1629
  %2216 = vmatprep.subr.bf16.mxu0 %v1635
  %2217 = vmatpush1.bf16.msra.mxu0 %v1634
  %2218 = vmatprep.subr.bf16.mxu0 %v1640
  %2219 = vmatpush1.bf16.msra.mxu0 %v1639
  %2220 = vmatprep.subr.bf16.mxu0 %v1645
  %2221 = vmatpush1.bf16.msra.mxu0 %v1644
  %2222 = vmatprep.subr.bf16.mxu0 %v1650
  %2223 = vmatpush1.bf16.msra.mxu0 %v1649
  %2224 = vmatprep.subr.bf16.mxu0 %v1655
  %2225 = vmatpush1.bf16.msra.mxu0 %v1654
  %2226 = vmatprep.subr.bf16.mxu0 %v1660
  %2227 = vmatpush1.bf16.msra.mxu0 %v1659
  %2228 = vmatprep.subr.bf16.mxu0 %v1665
  %2229 = vmatpush1.bf16.msra.mxu0 %v1664
  %2230 = vmatprep.subr.bf16.mxu0 %v1670
  %2231 = vmatpush1.bf16.msra.mxu0 %v1669
  %2232 = vmatprep.subr.bf16.mxu0 %v1675
  %2233 = vmatpush1.bf16.msra.mxu0 %v1674
  %2234 = vmatprep.subr.bf16.mxu0 %v1680
  %2235 = vmatpush1.bf16.msra.mxu0 %v1679
  %2236 = vmatprep.subr.bf16.mxu0 %v1685
  %2237 = vmatpush1.bf16.msra.mxu0 %v1684
  %2238 = vmatprep.subr.bf16.mxu0 %v1690
  %2239 = vmatpush1.bf16.msra.mxu0 %v1689
  %2240 = vmatprep.subr.bf16.mxu0 %v1695
  %2241 = vmatpush1.bf16.msra.mxu0 %v1694
  %2242 = vmatprep.subr.bf16.mxu0 %v1700
  %2243 = vmatpush1.bf16.msra.mxu0 %v1699
  %2244 = vmatprep.mubr.bf16.mxu0 %v333
  %2245 = vmatmul.mubr.bf16.gmra.mrb[0].mxu0 %v332
  %v2246 = vpop.f32.mrb[0].mxu0
  %v2247 = vadd.f32 %v2206, %v2246
  %v2248 = vpop.f32.mrb[0].mxu0
  %v2249 = vadd.f32 %v2208, %v2248
  %v2250 = vpop.f32.mrb[0].mxu0
  %v2251 = vpop.f32.mrb[0].mxu0
  %2252 = vdwg.mxu0
  %2253 = vmatprep.subr.bf16.mxu0 %v1705
  %2254 = vmatpush1.bf16.msra.mxu0 %v1704
  %2255 = vmatprep.subr.bf16.mxu0 %v1710
  %2256 = vmatpush1.bf16.msra.mxu0 %v1709
  %2257 = vmatprep.subr.bf16.mxu0 0
  %2258 = vmatpush1.bf16.msra.mxu0 0
  %2259 = vmatprep.subr.bf16.mxu0 0
  %2260 = vmatpush1.bf16.msra.mxu0 0
  %2261 = vmatprep.subr.bf16.mxu0 0
  %2262 = vmatpush1.bf16.msra.mxu0 0
  %2263 = vmatprep.subr.bf16.mxu0 0
  %2264 = vmatpush1.bf16.msra.mxu0 0
  %2265 = vmatprep.subr.bf16.mxu0 0
  %2266 = vmatpush1.bf16.msra.mxu0 0
  %2267 = vmatprep.subr.bf16.mxu0 0
  %2268 = vmatpush1.bf16.msra.mxu0 0
  %2269 = vmatprep.subr.bf16.mxu0 0
  %2270 = vmatpush1.bf16.msra.mxu0 0
  %2271 = vmatprep.subr.bf16.mxu0 0
  %2272 = vmatpush1.bf16.msra.mxu0 0
  %2273 = vmatprep.subr.bf16.mxu0 0
  %2274 = vmatpush1.bf16.msra.mxu0 0
  %2275 = vmatprep.subr.bf16.mxu0 0
  %2276 = vmatpush1.bf16.msra.mxu0 0
  %2277 = vmatprep.subr.bf16.mxu0 0
  %2278 = vmatpush1.bf16.msra.mxu0 0
  %2279 = vmatprep.subr.bf16.mxu0 0
  %2280 = vmatpush1.bf16.msra.mxu0 0
  %2281 = vmatprep.subr.bf16.mxu0 0
  %2282 = vmatpush1.bf16.msra.mxu0 0
  %2283 = vmatprep.subr.bf16.mxu0 0
  %2284 = vmatpush1.bf16.msra.mxu0 0
  %2285 = vmatprep.mubr.bf16.mxu0 0
  %2286 = vmatmul.mubr.bf16.gmra.mrb[0].mxu0 %v1964
  %v2287 = vpop.f32.mrb[0].mxu0
  %v2288 = vadd.f32 %v2247, %v2287
  %v2289 = vpop.f32.mrb[0].mxu0
  %v2290 = vadd.f32 %v2249, %v2289
  %v2291 = vpop.f32.mrb[0].mxu0
  %v2292 = vpop.f32.mrb[0].mxu0
  %2293 = vdwg.mxu0
  %2294 = vmatprep.subr.bf16.mxu0 0
  %2295 = vmatpush1.bf16.msra.mxu0 %v1466
  %2296 = vmatprep.subr.bf16.mxu0 0
  %2297 = vmatpush1.bf16.msra.mxu0 %v1471
  %2298 = vmatprep.subr.bf16.mxu0 0
  %2299 = vmatpush1.bf16.msra.mxu0 %v1476
  %2300 = vmatprep.subr.bf16.mxu0 0
  %2301 = vmatpush1.bf16.msra.mxu0 %v1481
  %2302 = vmatprep.subr.bf16.mxu0 0
  %2303 = vmatpush1.bf16.msra.mxu0 %v1486
  %2304 = vmatprep.subr.bf16.mxu0 0
  %2305 = vmatpush1.bf16.msra.mxu0 %v1491
  %2306 = vmatprep.subr.bf16.mxu0 0
  %2307 = vmatpush1.bf16.msra.mxu0 %v1496
  %2308 = vmatprep.subr.bf16.mxu0 0
  %2309 = vmatpush1.bf16.msra.mxu0 %v1501
  %2310 = vmatprep.subr.bf16.mxu0 0
  %2311 = vmatpush1.bf16.msra.mxu0 %v1506
  %2312 = vmatprep.subr.bf16.mxu0 0
  %2313 = vmatpush1.bf16.msra.mxu0 %v1511
  %2314 = vmatprep.subr.bf16.mxu0 0
  %2315 = vmatpush1.bf16.msra.mxu0 %v1516
  %2316 = vmatprep.subr.bf16.mxu0 0
  %2317 = vmatpush1.bf16.msra.mxu0 %v1521
  %2318 = vmatprep.subr.bf16.mxu0 0
  %2319 = vmatpush1.bf16.msra.mxu0 %v1526
  %2320 = vmatprep.subr.bf16.mxu0 0
  %2321 = vmatpush1.bf16.msra.mxu0 %v1531
  %2322 = vmatprep.subr.bf16.mxu0 0
  %2323 = vmatpush1.bf16.msra.mxu0 %v1536
  %2324 = vmatprep.subr.bf16.mxu0 0
  %2325 = vmatpush1.bf16.msra.mxu0 %v1541
  %2326 = vmatprep.mubr.bf16.mxu0 %v329
  %2327 = vmatmul.mubr.bf16.gmra.mrb[0].mxu0 %v328
  %v2328 = vpop.f32.mrb[0].mxu0
  %v2329 = vadd.f32 %v656, %v2328
  %v2330 = vpop.f32.mrb[0].mxu0
  %v2331 = vpop.f32.mrb[0].mxu0
  %v2332 = vpop.f32.mrb[0].mxu0
  %2333 = vdwg.mxu0
  %2334 = vmatprep.subr.bf16.mxu0 0
  %2335 = vmatpush1.bf16.msra.mxu0 %v1546
  %2336 = vmatprep.subr.bf16.mxu0 0
  %2337 = vmatpush1.bf16.msra.mxu0 %v1551
  %2338 = vmatprep.subr.bf16.mxu0 0
  %2339 = vmatpush1.bf16.msra.mxu0 %v1556
  %2340 = vmatprep.subr.bf16.mxu0 0
  %2341 = vmatpush1.bf16.msra.mxu0 %v1561
  %2342 = vmatprep.subr.bf16.mxu0 0
  %2343 = vmatpush1.bf16.msra.mxu0 %v1566
  %2344 = vmatprep.subr.bf16.mxu0 0
  %2345 = vmatpush1.bf16.msra.mxu0 %v1571
  %2346 = vmatprep.subr.bf16.mxu0 0
  %2347 = vmatpush1.bf16.msra.mxu0 %v1576
  %2348 = vmatprep.subr.bf16.mxu0 0
  %2349 = vmatpush1.bf16.msra.mxu0 %v1581
  %2350 = vmatprep.subr.bf16.mxu0 0
  %2351 = vmatpush1.bf16.msra.mxu0 %v1586
  %2352 = vmatprep.subr.bf16.mxu0 0
  %2353 = vmatpush1.bf16.msra.mxu0 %v1591
  %2354 = vmatprep.subr.bf16.mxu0 0
  %2355 = vmatpush1.bf16.msra.mxu0 %v1596
  %2356 = vmatprep.subr.bf16.mxu0 0
  %2357 = vmatpush1.bf16.msra.mxu0 %v1601
  %2358 = vmatprep.subr.bf16.mxu0 0
  %2359 = vmatpush1.bf16.msra.mxu0 %v1606
  %2360 = vmatprep.subr.bf16.mxu0 0
  %2361 = vmatpush1.bf16.msra.mxu0 %v1611
  %2362 = vmatprep.subr.bf16.mxu0 0
  %2363 = vmatpush1.bf16.msra.mxu0 %v1616
  %2364 = vmatprep.subr.bf16.mxu0 0
  %2365 = vmatpush1.bf16.msra.mxu0 %v1621
  %2366 = vmatprep.mubr.bf16.mxu0 %v331
  %2367 = vmatmul.mubr.bf16.gmra.mrb[0].mxu0 %v330
  %v2368 = vpop.f32.mrb[0].mxu0
  %v2369 = vadd.f32 %v2329, %v2368
  %v2370 = vpop.f32.mrb[0].mxu0
  %v2371 = vpop.f32.mrb[0].mxu0
  %v2372 = vpop.f32.mrb[0].mxu0
  %2373 = vdwg.mxu0
  %2374 = vmatprep.subr.bf16.mxu0 0
  %2375 = vmatpush1.bf16.msra.mxu0 %v1626
  %2376 = vmatprep.subr.bf16.mxu0 0
  %2377 = vmatpush1.bf16.msra.mxu0 %v1631
  %2378 = vmatprep.subr.bf16.mxu0 0
  %2379 = vmatpush1.bf16.msra.mxu0 %v1636
  %2380 = vmatprep.subr.bf16.mxu0 0
  %2381 = vmatpush1.bf16.msra.mxu0 %v1641
  %2382 = vmatprep.subr.bf16.mxu0 0
  %2383 = vmatpush1.bf16.msra.mxu0 %v1646
  %2384 = vmatprep.subr.bf16.mxu0 0
  %2385 = vmatpush1.bf16.msra.mxu0 %v1651
  %2386 = vmatprep.subr.bf16.mxu0 0
  %2387 = vmatpush1.bf16.msra.mxu0 %v1656
  %2388 = vmatprep.subr.bf16.mxu0 0
  %2389 = vmatpush1.bf16.msra.mxu0 %v1661
  %2390 = vmatprep.subr.bf16.mxu0 0
  %2391 = vmatpush1.bf16.msra.mxu0 %v1666
  %2392 = vmatprep.subr.bf16.mxu0 0
  %2393 = vmatpush1.bf16.msra.mxu0 %v1671
  %2394 = vmatprep.subr.bf16.mxu0 0
  %2395 = vmatpush1.bf16.msra.mxu0 %v1676
  %2396 = vmatprep.subr.bf16.mxu0 0
  %2397 = vmatpush1.bf16.msra.mxu0 %v1681
  %2398 = vmatprep.subr.bf16.mxu0 0
  %2399 = vmatpush1.bf16.msra.mxu0 %v1686
  %2400 = vmatprep.subr.bf16.mxu0 0
  %2401 = vmatpush1.bf16.msra.mxu0 %v1691
  %2402 = vmatprep.subr.bf16.mxu0 0
  %2403 = vmatpush1.bf16.msra.mxu0 %v1696
  %2404 = vmatprep.subr.bf16.mxu0 0
  %2405 = vmatpush1.bf16.msra.mxu0 %v1701
  %2406 = vmatprep.mubr.bf16.mxu0 %v333
  %2407 = vmatmul.mubr.bf16.gmra.mrb[0].mxu0 %v332
  %v2408 = vpop.f32.mrb[0].mxu0
  %v2409 = vadd.f32 %v2369, %v2408
  %v2410 = vpop.f32.mrb[0].mxu0
  %v2411 = vpop.f32.mrb[0].mxu0
  %v2412 = vpop.f32.mrb[0].mxu0
  %2413 = vdwg.mxu0
  %2414 = vmatprep.subr.bf16.mxu0 0
  %2415 = vmatpush1.bf16.msra.mxu0 %v1706
  %2416 = vmatprep.subr.bf16.mxu0 0
  %2417 = vmatpush1.bf16.msra.mxu0 %v1711
  %2418 = vmatprep.subr.bf16.mxu0 0
  %2419 = vmatpush1.bf16.msra.mxu0 0
  %2420 = vmatprep.subr.bf16.mxu0 0
  %2421 = vmatpush1.bf16.msra.mxu0 0
  %2422 = vmatprep.subr.bf16.mxu0 0
  %2423 = vmatpush1.bf16.msra.mxu0 0
  %2424 = vmatprep.subr.bf16.mxu0 0
  %2425 = vmatpush1.bf16.msra.mxu0 0
  %2426 = vmatprep.subr.bf16.mxu0 0
  %2427 = vmatpush1.bf16.msra.mxu0 0
  %2428 = vmatprep.subr.bf16.mxu0 0
  %2429 = vmatpush1.bf16.msra.mxu0 0
  %2430 = vmatprep.subr.bf16.mxu0 0
  %2431 = vmatpush1.bf16.msra.mxu0 0
  %2432 = vmatprep.subr.bf16.mxu0 0
  %2433 = vmatpush1.bf16.msra.mxu0 0
  %2434 = vmatprep.subr.bf16.mxu0 0
  %2435 = vmatpush1.bf16.msra.mxu0 0
  %2436 = vmatprep.subr.bf16.mxu0 0
  %2437 = vmatpush1.bf16.msra.mxu0 0
  %2438 = vmatprep.subr.bf16.mxu0 0
  %2439 = vmatpush1.bf16.msra.mxu0 0
  %2440 = vmatprep.subr.bf16.mxu0 0
  %2441 = vmatpush1.bf16.msra.mxu0 0
  %2442 = vmatprep.subr.bf16.mxu0 0
  %2443 = vmatpush1.bf16.msra.mxu0 0
  %2444 = vmatprep.subr.bf16.mxu0 0
  %2445 = vmatpush1.bf16.msra.mxu0 0
  %2446 = vmatprep.mubr.bf16.mxu0 0
  %2447 = vmatmul.mubr.bf16.gmra.mrb[0].mxu0 %v1964
  %v2448 = vpop.f32.mrb[0].mxu0
  %v2449 = vadd.f32 %v2409, %v2448
  %v2450 = vpop.f32.mrb[0].mxu0
  %v2451 = vpop.f32.mrb[0].mxu0
  %v2452 = vpop.f32.mrb[0].mxu0
  %2453 = vdwg.mxu0
  %v2454 = vmax.f32 %v2124, 0.0
  %v2455 = vmax.f32 %v2126, 0.0
  %v2456 = vmax.f32 %v2288, 0.0
  %v2457 = vmax.f32 %v2290, 0.0
  %v2458 = vmax.f32 %v2449, 0.0
  %v2459 = vpack.c.bf16 %v2454, %v2454
  %v2460 = vpack.c.bf16 %v2455, %v2455
  %v2461 = vpack.c.bf16 %v2456, %v2456
  %v2462 = vpack.c.bf16 %v2457, %v2457
  %v2463 = vpack.c.bf16 %v2458, %v2458
  %v2464 = vld [vmem:[%s5] sm:$0xf]
  %v2465 = vld [vmem:[%s5 + $0x4] sm:$0xf]
  %v2466 = vld [vmem:[%s5 + $0x8] sm:$0xf]
  %v2467 = vld [vmem:[%s5 + $0xc] sm:$0xf]
  %v2468 = vld [vmem:[%s5 + $0x10] sm:$0xf]
  %v2469 = vld [vmem:[%s5 + $0x14] sm:$0xf]
  %v2470 = vld [vmem:[%s5 + $0x18] sm:$0xf]
  %v2471 = vld [vmem:[%s5 + $0x1c] sm:$0xf]
  %v2472 = vld [vmem:[%s5 + $0x20] sm:$0xf]
  %v2473 = vld [vmem:[%s5 + $0x24] sm:$0xf]
  %v2474 = vld [vmem:[%s5 + $0x28] sm:$0xf]
  %v2475 = vld [vmem:[%s5 + $0x2c] sm:$0xf]
  %v2476 = vld [vmem:[%s5 + $0x30] sm:$0xf]
  %v2477 = vld [vmem:[%s5 + $0x34] sm:$0xf]
  %v2478 = vld [vmem:[%s5 + $0x38] sm:$0xf]
  %v2479 = vld [vmem:[%s5 + $0x3c] sm:$0xf]
  %v2480 = vld [vmem:[%s5 + $0x40] sm:$0xf]
  %v2481 = vld [vmem:[%s5 + $0x44] sm:$0xf]
  %v2482 = vld [vmem:[%s5 + $0x48] sm:$0xf]
  %v2483 = vld [vmem:[%s5 + $0x4c] sm:$0xf]
  %v2484 = vld [vmem:[%s5 + $0x50] sm:$0xf]
  %v2485 = vld [vmem:[%s5 + $0x54] sm:$0xf]
  %v2486 = vld [vmem:[%s5 + $0x58] sm:$0xf]
  %v2487 = vld [vmem:[%s5 + $0x5c] sm:$0xf]
  %v2488 = vld [vmem:[%s5 + $0x60] sm:$0xf]
  %v2489 = vld [vmem:[%s5 + $0x64] sm:$0xf]
  %v2490 = vld [vmem:[%s5 + $0x68] sm:$0xf]
  %v2491 = vld [vmem:[%s5 + $0x6c] sm:$0xf]
  %v2492 = vld [vmem:[%s5 + $0x70] sm:$0xf]
  %v2493 = vld [vmem:[%s5 + $0x74] sm:$0xf]
  %v2494 = vld [vmem:[%s5 + $0x78] sm:$0xf]
  %v2495 = vld [vmem:[%s5 + $0x7c] sm:$0xf]
  %v2496 = vld [vmem:[%s5 + $0x80] sm:$0xf]
  %v2497 = vld [vmem:[%s5 + $0x84] sm:$0xf]
  %v2498 = vld [vmem:[%s5 + $0x88] sm:$0xf]
  %v2499 = vld [vmem:[%s5 + $0x8c] sm:$0xf]
  %v2500 = vld [vmem:[%s5 + $0x90] sm:$0xf]
  %v2501 = vld [vmem:[%s5 + $0x94] sm:$0xf]
  %v2502 = vld [vmem:[%s5 + $0x98] sm:$0xf]
  %v2503 = vld [vmem:[%s5 + $0x9c] sm:$0xf]
  %v2504 = vld [vmem:[%s5 + $0xa0] sm:$0xf]
  %v2505 = vld [vmem:[%s5 + $0xa4] sm:$0xf]
  %v2506 = vld [vmem:[%s5 + $0xa8] sm:$0xf]
  %v2507 = vld [vmem:[%s5 + $0xac] sm:$0xf]
  %v2508 = vld [vmem:[%s5 + $0xb0] sm:$0xf]
  %v2509 = vld [vmem:[%s5 + $0xb4] sm:$0xf]
  %v2510 = vld [vmem:[%s5 + $0xb8] sm:$0xf]
  %v2511 = vld [vmem:[%s5 + $0xbc] sm:$0xf]
  %v2512 = vld [vmem:[%s5 + $0xc0] sm:$0xf]
  %v2513 = vld [vmem:[%s5 + $0xc4] sm:$0xf]
  %v2514 = vld [vmem:[%s5 + $0xc8] sm:$0xf]
  %v2515 = vld [vmem:[%s5 + $0xcc] sm:$0xf]
  %v2516 = vld [vmem:[%s5 + $0xd0] sm:$0xf]
  %v2517 = vld [vmem:[%s5 + $0xd4] sm:$0xf]
  %v2518 = vld [vmem:[%s5 + $0xd8] sm:$0xf]
  %v2519 = vld [vmem:[%s5 + $0xdc] sm:$0xf]
  %v2520 = vld [vmem:[%s5 + $0xe0] sm:$0xf]
  %v2521 = vld [vmem:[%s5 + $0xe4] sm:$0xf]
  %v2522 = vld [vmem:[%s5 + $0xe8] sm:$0xf]
  %v2523 = vld [vmem:[%s5 + $0xec] sm:$0xf]
  %v2524 = vld [vmem:[%s5 + $0xf0] sm:$0xf]
  %v2525 = vld [vmem:[%s5 + $0xf4] sm:$0xf]
  %v2526 = vld [vmem:[%s5 + $0xf8] sm:$0xf]
  %v2527 = vld [vmem:[%s5 + $0xfc] sm:$0xf]
  %v2528 = vld [vmem:[%s5 + $0x100] sm:$0xf]
  %v2529 = vld [vmem:[%s5 + $0x104] sm:$0xf]
  %v2530 = vld [vmem:[%s5 + $0x108] sm:$0xf]
  %v2531 = vld [vmem:[%s5 + $0x10c] sm:$0xf]
  %v2532 = vld [vmem:[%s5 + $0x110] sm:$0xf]
  %v2533 = vld [vmem:[%s5 + $0x114] sm:$0xf]
  %v2534 = vld [vmem:[%s5 + $0x118] sm:$0xf]
  %v2535 = vld [vmem:[%s5 + $0x11c] sm:$0xf]
  %v2536 = vld [vmem:[%s5 + $0x120] sm:$0xf]
  %v2537 = vld [vmem:[%s5 + $0x124] sm:$0xf]
  %v2538 = vld [vmem:[%s5 + $0x128] sm:$0xf]
  %v2539 = vld [vmem:[%s6] sm:$0x1]
  %v2541 = vlaneseq
  %v2542 = vshrl.u32 %v2541, 7
  %v2543 = vsub.s32 0, %v2542
  %v2544 = vrot.slane %v2539, %v2543
  %v2621 = vunpack.c.l.b16 %v2464
  %v2622 = vunpack.c.l.b16 %v2465
  %v2623 = vunpack.c.l.b16 %v2466
  %v2624 = vunpack.c.l.b16 %v2467
  %v2625 = vunpack.c.l.b16 %v2468
  %v2626 = vunpack.c.l.b16 %v2469
  %v2627 = vunpack.c.l.b16 %v2470
  %v2628 = vunpack.c.l.b16 %v2471
  %v2629 = vunpack.c.l.b16 %v2472
  %v2630 = vunpack.c.l.b16 %v2473
  %v2631 = vunpack.c.l.b16 %v2474
  %v2632 = vunpack.c.l.b16 %v2475
  %v2633 = vunpack.c.l.b16 %v2476
  %v2634 = vunpack.c.l.b16 %v2477
  %v2635 = vunpack.c.l.b16 %v2478
  %v2636 = vunpack.c.l.b16 %v2479
  %v2637 = vunpack.c.l.b16 %v2480
  %v2638 = vunpack.c.l.b16 %v2481
  %v2639 = vunpack.c.l.b16 %v2482
  %v2640 = vunpack.c.l.b16 %v2483
  %v2641 = vunpack.c.l.b16 %v2484
  %v2642 = vunpack.c.l.b16 %v2485
  %v2643 = vunpack.c.l.b16 %v2486
  %v2644 = vunpack.c.l.b16 %v2487
  %v2645 = vunpack.c.l.b16 %v2488
  %v2646 = vunpack.c.l.b16 %v2489
  %v2647 = vunpack.c.l.b16 %v2490
  %v2648 = vunpack.c.l.b16 %v2491
  %v2649 = vunpack.c.l.b16 %v2492
  %v2650 = vunpack.c.l.b16 %v2493
  %v2651 = vunpack.c.l.b16 %v2494
  %v2652 = vunpack.c.l.b16 %v2495
  %v2653 = vunpack.c.l.b16 %v2496
  %v2654 = vunpack.c.l.b16 %v2497
  %v2655 = vunpack.c.l.b16 %v2498
  %v2656 = vunpack.c.l.b16 %v2499
  %v2657 = vunpack.c.l.b16 %v2500
  %v2658 = vunpack.c.l.b16 %v2501
  %v2659 = vunpack.c.l.b16 %v2502
  %v2660 = vunpack.c.l.b16 %v2503
  %v2661 = vunpack.c.l.b16 %v2504
  %v2662 = vunpack.c.l.b16 %v2505
  %v2663 = vunpack.c.l.b16 %v2506
  %v2664 = vunpack.c.l.b16 %v2507
  %v2665 = vunpack.c.l.b16 %v2508
  %v2666 = vunpack.c.l.b16 %v2509
  %v2667 = vunpack.c.l.b16 %v2510
  %v2668 = vunpack.c.l.b16 %v2511
  %v2669 = vunpack.c.l.b16 %v2512
  %v2670 = vunpack.c.l.b16 %v2513
  %v2671 = vunpack.c.l.b16 %v2514
  %v2672 = vunpack.c.l.b16 %v2515
  %v2673 = vunpack.c.l.b16 %v2516
  %v2674 = vunpack.c.l.b16 %v2517
  %v2675 = vunpack.c.l.b16 %v2518
  %v2676 = vunpack.c.l.b16 %v2519
  %v2677 = vunpack.c.l.b16 %v2520
  %v2678 = vunpack.c.l.b16 %v2521
  %v2679 = vunpack.c.l.b16 %v2522
  %v2680 = vunpack.c.l.b16 %v2523
  %v2681 = vunpack.c.l.b16 %v2524
  %v2682 = vunpack.c.l.b16 %v2525
  %v2683 = vunpack.c.l.b16 %v2526
  %v2684 = vunpack.c.l.b16 %v2527
  %v2685 = vunpack.c.l.b16 %v2528
  %v2686 = vunpack.c.l.b16 %v2529
  %v2687 = vunpack.c.l.b16 %v2530
  %v2688 = vunpack.c.l.b16 %v2531
  %v2689 = vunpack.c.l.b16 %v2532
  %v2690 = vunpack.c.l.b16 %v2533
  %v2691 = vunpack.c.l.b16 %v2534
  %v2692 = vunpack.c.l.b16 %v2535
  %v2693 = vunpack.c.l.b16 %v2536
  %v2694 = vunpack.c.l.b16 %v2537
  %v2695 = vunpack.c.l.b16 %v2538
  %v2696 = vpack.c.b16 %v2622, %v2621
  %v2697 = vpack.c.b16 %v2624, %v2623
  %v2698 = vpack.c.b16 %v2626, %v2625
  %v2699 = vpack.c.b16 %v2628, %v2627
  %v2700 = vpack.c.b16 %v2630, %v2629
  %v2701 = vpack.c.b16 %v2632, %v2631
  %v2702 = vpack.c.b16 %v2634, %v2633
  %v2703 = vpack.c.b16 %v2636, %v2635
  %v2704 = vpack.c.b16 %v2638, %v2637
  %v2705 = vpack.c.b16 %v2640, %v2639
  %v2706 = vpack.c.b16 %v2642, %v2641
  %v2707 = vpack.c.b16 %v2644, %v2643
  %v2708 = vpack.c.b16 %v2646, %v2645
  %v2709 = vpack.c.b16 %v2648, %v2647
  %v2710 = vpack.c.b16 %v2650, %v2649
  %v2711 = vpack.c.b16 %v2652, %v2651
  %v2712 = vpack.c.b16 %v2654, %v2653
  %v2713 = vpack.c.b16 %v2656, %v2655
  %v2714 = vpack.c.b16 %v2658, %v2657
  %v2715 = vpack.c.b16 %v2660, %v2659
  %v2716 = vpack.c.b16 %v2662, %v2661
  %v2717 = vpack.c.b16 %v2664, %v2663
  %v2718 = vpack.c.b16 %v2666, %v2665
  %v2719 = vpack.c.b16 %v2668, %v2667
  %v2720 = vpack.c.b16 %v2670, %v2669
  %v2721 = vpack.c.b16 %v2672, %v2671
  %v2722 = vpack.c.b16 %v2674, %v2673
  %v2723 = vpack.c.b16 %v2676, %v2675
  %v2724 = vpack.c.b16 %v2678, %v2677
  %v2725 = vpack.c.b16 %v2680, %v2679
  %v2726 = vpack.c.b16 %v2682, %v2681
  %v2727 = vpack.c.b16 %v2684, %v2683
  %v2728 = vpack.c.b16 %v2686, %v2685
  %v2729 = vpack.c.b16 %v2688, %v2687
  %v2730 = vpack.c.b16 %v2690, %v2689
  %v2731 = vpack.c.b16 %v2692, %v2691
  %v2732 = vpack.c.b16 %v2694, %v2693
  %v2733 = vpack.c.b16 %v2695, %v2695
  %vm2771 = vcmask 719872
  %v2773 = vsel %vm2771, %v2463, 0
  %v2776 = vsel %vm136, %v2733, 0
  %2778 = vmatprep.subr.bf16.mxu0 0
  %2779 = vmatpush1.bf16.msra.mxu0 %v2696
  %2780 = vmatprep.subr.bf16.mxu0 0
  %2781 = vmatpush1.bf16.msra.mxu0 %v2697
  %2782 = vmatprep.subr.bf16.mxu0 0
  %2783 = vmatpush1.bf16.msra.mxu0 %v2698
  %2784 = vmatprep.subr.bf16.mxu0 0
  %2785 = vmatpush1.bf16.msra.mxu0 %v2699
  %2786 = vmatprep.subr.bf16.mxu0 0
  %2787 = vmatpush1.bf16.msra.mxu0 %v2700
  %2788 = vmatprep.subr.bf16.mxu0 0
  %2789 = vmatpush1.bf16.msra.mxu0 %v2701
  %2790 = vmatprep.subr.bf16.mxu0 0
  %2791 = vmatpush1.bf16.msra.mxu0 %v2702
  %2792 = vmatprep.subr.bf16.mxu0 0
  %2793 = vmatpush1.bf16.msra.mxu0 %v2703
  %2794 = vmatprep.subr.bf16.mxu0 0
  %2795 = vmatpush1.bf16.msra.mxu0 %v2704
  %2796 = vmatprep.subr.bf16.mxu0 0
  %2797 = vmatpush1.bf16.msra.mxu0 %v2705
  %2798 = vmatprep.subr.bf16.mxu0 0
  %2799 = vmatpush1.bf16.msra.mxu0 %v2706
  %2800 = vmatprep.subr.bf16.mxu0 0
  %2801 = vmatpush1.bf16.msra.mxu0 %v2707
  %2802 = vmatprep.subr.bf16.mxu0 0
  %2803 = vmatpush1.bf16.msra.mxu0 %v2708
  %2804 = vmatprep.subr.bf16.mxu0 0
  %2805 = vmatpush1.bf16.msra.mxu0 %v2709
  %2806 = vmatprep.subr.bf16.mxu0 0
  %2807 = vmatpush1.bf16.msra.mxu0 %v2710
  %2808 = vmatprep.subr.bf16.mxu0 0
  %2809 = vmatpush1.bf16.msra.mxu0 %v2711
  %2810 = vmatprep.mubr.bf16.mxu0 %v2460
  %2811 = vmatmul.mubr.bf16.gmra.mrb[0].mxu0 %v2459
  %v2812 = vpop.f32.mrb[0].mxu0
  %v2813 = vadd.f32 %v2544, %v2812
  %v2814 = vpop.f32.mrb[0].mxu0
  %v2815 = vpop.f32.mrb[0].mxu0
  %v2816 = vpop.f32.mrb[0].mxu0
  %2817 = vdwg.mxu0
  %2818 = vmatprep.subr.bf16.mxu0 0
  %2819 = vmatpush1.bf16.msra.mxu0 %v2712
  %2820 = vmatprep.subr.bf16.mxu0 0
  %2821 = vmatpush1.bf16.msra.mxu0 %v2713
  %2822 = vmatprep.subr.bf16.mxu0 0
  %2823 = vmatpush1.bf16.msra.mxu0 %v2714
  %2824 = vmatprep.subr.bf16.mxu0 0
  %2825 = vmatpush1.bf16.msra.mxu0 %v2715
  %2826 = vmatprep.subr.bf16.mxu0 0
  %2827 = vmatpush1.bf16.msra.mxu0 %v2716
  %2828 = vmatprep.subr.bf16.mxu0 0
  %2829 = vmatpush1.bf16.msra.mxu0 %v2717
  %2830 = vmatprep.subr.bf16.mxu0 0
  %2831 = vmatpush1.bf16.msra.mxu0 %v2718
  %2832 = vmatprep.subr.bf16.mxu0 0
  %2833 = vmatpush1.bf16.msra.mxu0 %v2719
  %2834 = vmatprep.subr.bf16.mxu0 0
  %2835 = vmatpush1.bf16.msra.mxu0 %v2720
  %2836 = vmatprep.subr.bf16.mxu0 0
  %2837 = vmatpush1.bf16.msra.mxu0 %v2721
  %2838 = vmatprep.subr.bf16.mxu0 0
  %2839 = vmatpush1.bf16.msra.mxu0 %v2722
  %2840 = vmatprep.subr.bf16.mxu0 0
  %2841 = vmatpush1.bf16.msra.mxu0 %v2723
  %2842 = vmatprep.subr.bf16.mxu0 0
  %2843 = vmatpush1.bf16.msra.mxu0 %v2724
  %2844 = vmatprep.subr.bf16.mxu0 0
  %2845 = vmatpush1.bf16.msra.mxu0 %v2725
  %2846 = vmatprep.subr.bf16.mxu0 0
  %2847 = vmatpush1.bf16.msra.mxu0 %v2726
  %2848 = vmatprep.subr.bf16.mxu0 0
  %2849 = vmatpush1.bf16.msra.mxu0 %v2727
  %2850 = vmatprep.mubr.bf16.mxu0 %v2462
  %2851 = vmatmul.mubr.bf16.gmra.mrb[0].mxu0 %v2461
  %v2852 = vpop.f32.mrb[0].mxu0
  %v2853 = vadd.f32 %v2813, %v2852
  %v2854 = vpop.f32.mrb[0].mxu0
  %v2855 = vpop.f32.mrb[0].mxu0
  %v2856 = vpop.f32.mrb[0].mxu0
  %2857 = vdwg.mxu0
  %2858 = vmatprep.subr.bf16.mxu0 0
  %2859 = vmatpush1.bf16.msra.mxu0 %v2728
  %2860 = vmatprep.subr.bf16.mxu0 0
  %2861 = vmatpush1.bf16.msra.mxu0 %v2729
  %2862 = vmatprep.subr.bf16.mxu0 0
  %2863 = vmatpush1.bf16.msra.mxu0 %v2730
  %2864 = vmatprep.subr.bf16.mxu0 0
  %2865 = vmatpush1.bf16.msra.mxu0 %v2731
  %2866 = vmatprep.subr.bf16.mxu0 0
  %2867 = vmatpush1.bf16.msra.mxu0 %v2732
  %2868 = vmatprep.subr.bf16.mxu0 0
  %2869 = vmatpush1.bf16.msra.mxu0 %v2776
  %2870 = vmatprep.subr.bf16.mxu0 0
  %2871 = vmatpush1.bf16.msra.mxu0 0
  %2872 = vmatprep.subr.bf16.mxu0 0
  %2873 = vmatpush1.bf16.msra.mxu0 0
  %2874 = vmatprep.subr.bf16.mxu0 0
  %2875 = vmatpush1.bf16.msra.mxu0 0
  %2876 = vmatprep.subr.bf16.mxu0 0
  %2877 = vmatpush1.bf16.msra.mxu0 0
  %2878 = vmatprep.subr.bf16.mxu0 0
  %2879 = vmatpush1.bf16.msra.mxu0 0
  %2880 = vmatprep.subr.bf16.mxu0 0
  %2881 = vmatpush1.bf16.msra.mxu0 0
  %2882 = vmatprep.subr.bf16.mxu0 0
  %2883 = vmatpush1.bf16.msra.mxu0 0
  %2884 = vmatprep.subr.bf16.mxu0 0
  %2885 = vmatpush1.bf16.msra.mxu0 0
  %2886 = vmatprep.subr.bf16.mxu0 0
  %2887 = vmatpush1.bf16.msra.mxu0 0
  %2888 = vmatprep.subr.bf16.mxu0 0
  %2889 = vmatpush1.bf16.msra.mxu0 0
  %2890 = vmatprep.mubr.bf16.mxu0 0
  %2891 = vmatmul.mubr.bf16.gmra.mrb[0].mxu0 %v2773
  %v2892 = vpop.f32.mrb[0].mxu0
  %v2893 = vadd.f32 %v2853, %v2892
  %v2894 = vpop.f32.mrb[0].mxu0
  %v2895 = vpop.f32.mrb[0].mxu0
  %v2896 = vpop.f32.mrb[0].mxu0
  %2897 = vdwg.mxu0
  %v2898 = vtanh.pop %v2893
  %2899 = vst [vmem:[%s7] sm:$0xff] %v2898
  // Predicated region
  $region30: #{actor_forward.1} parent=0 // pred_check
    _
  $region31: #{actor_forward.1} parent=0 // pred_check_branch
    %2901 = sbr.rel (0) target = $region33
  $region32: #{actor_forward.1} parent=0 // pred_region
    _
  $region33: #{actor_forward.1} parent=0 // pred_fallthru
    _
  // Predicated region
  $region34: #{actor_forward.1} parent=0 // pred_check
    _
  $region35: #{actor_forward.1} parent=0 // pred_check_branch
    %2903 = sbr.rel (0) target = $region37
  $region36: #{actor_forward.1} parent=0 // pred_region
    _
  $region37: #{actor_forward.1} parent=0 // pred_fallthru
    _

</llo_original>
